<compile_context>
chip_gen: v6e
topology: v6e:2x2x1
jax: 0.10.0
libtpu: 0.0.40
codegen_flags: <defaults>
</compile_context>

<pallas_src>
import functools

import jax
import jax.numpy as jnp
from jax.experimental import pallas as pl
from jax.experimental.pallas import tpu as pltpu

NUM_CLASSES = 5      # EfficientNet head: num_classes=5
O_PAD = 128          # classifier output padded to 128 lanes, sliced to 5 in wrapper
STEM_F = 48          # EfficientNet-B4 stem width

# channel-range boundaries of the 7 scalar biases (last range runs to C)
_BOUNDS = [0, 69, 103, 120, 137, 189, 207]
_BIAS_NAMES = ["bias_eeg", "bias_eog", "bias_emg", "bias_ecg",
               "bias_flow", "bias_Thorax", "bias_Abdomen"]


# ---------------------------------------------------------------------------
# Fused kernel: bias-add(taps) -> stem conv (MXU) -> swish -> GAP -> FC head
#   xt : (1, 9, S) f32   bt : (9, S) f32   wt : (F, 9) bf16   sb : (F, 1) f32
#   cw : (F, O_PAD) bf16 cb : (1, O_PAD) f32        out : (1, 1, O_PAD) f32
# ---------------------------------------------------------------------------
def _fused_kernel(xt_ref, bt_ref, wt_ref, sb_ref, cw_ref, cb_ref, o_ref, *, inv_s):
    # Module's own compute: piecewise scalar bias add, in f32, on the taps
    # (bias map is zero at padded positions, matching "add bias, then pad").
    taps = xt_ref[0] + bt_ref[...]                                  # (9, S) f32

    # Stem 3x3/s2 conv as one matmul; spatial dim stays lane-dense.
    z = jnp.dot(wt_ref[...], taps.astype(jnp.bfloat16),
                preferred_element_type=jnp.float32)                 # (F, S) f32
    z = z + sb_ref[...]                                             # lane broadcast
    a = z * jax.nn.sigmoid(z)                                       # swish (EUP), f32

    # Global average pool over spatial (lane) axis.
    pooled = jnp.sum(a, axis=1, keepdims=True) * inv_s              # (F, 1) f32

    # Tiny 5-class head on the VPU: broadcast-multiply + sublane reduce.
    logits = jnp.sum(pooled * cw_ref[...].astype(jnp.float32),
                     axis=0, keepdims=True) + cb_ref[...]           # (1, O_PAD)
    o_ref[...] = logits.reshape(o_ref.shape)


def fused_stem_pool_fc(x_taps, bias_taps, stem_w, stem_b, cls_w, cls_b):
    n, k, s = x_taps.shape
    f = stem_w.shape[0]
    # Per-batch VMEM: taps (x + bias) + conv/swish temps; guard before reuse at
    # larger image sizes instead of silently blowing the budget.
    vmem_est = 4 * (2 * k * s + 2 * f * s)
    assert vmem_est < 24 * 1024 * 1024, (
        "per-batch block too large for VMEM; add a spatial grid axis")
    kernel = functools.partial(_fused_kernel, inv_s=1.0 / float(s))
    out = pl.pallas_call(
        kernel,
        out_shape=jax.ShapeDtypeStruct((n, 1, O_PAD), jnp.float32),
        grid=(n,),
        in_specs=[
            pl.BlockSpec((1, k, s), lambda b: (b, 0, 0)),
            pl.BlockSpec((k, s), lambda b: (0, 0)),
            pl.BlockSpec((f, k), lambda b: (0, 0)),
            pl.BlockSpec((f, 1), lambda b: (0, 0)),
            pl.BlockSpec((f, O_PAD), lambda b: (0, 0)),
            pl.BlockSpec((1, O_PAD), lambda b: (0, 0)),
        ],
        out_specs=pl.BlockSpec((1, 1, O_PAD), lambda b: (b, 0, 0)),
        compiler_params=pltpu.CompilerParams(
            dimension_semantics=("parallel",),   # one batch per v7x TensorCore
        ),
    )(x_taps, bias_taps, stem_w, stem_b, cls_w, cls_b)
    return out[:, 0, :]


# ---------------------------------------------------------------------------
# Glue: im2col taps for the 3x3 / stride-2 / pad-1 stem conv (plain JAX).
# Output layout (N, 9, Ho*Wo): tap index on the sublane-ish axis, spatial in
# lanes.  XLA fuses the pad/slice/stack; no 9-wide-lane patches layout.
# ---------------------------------------------------------------------------
def _im2col_taps_3x3_s2_p1(img):
    """img: (N, H, W) single channel -> (taps (N, 9, Ho*Wo), Ho, Wo)."""
    n, h, w = img.shape
    pad, kk, st = 1, 3, 2
    xp = jnp.pad(img, ((0, 0), (pad, pad), (pad, pad)))
    ho = (h + 2 * pad - kk) // st + 1
    wo = (w + 2 * pad - kk) // st + 1
    taps = [xp[:, i:i + ho * st:st, j:j + wo * st:st].reshape(n, ho * wo)
            for i in range(kk) for j in range(kk)]
    return jnp.stack(taps, axis=1), ho, wo


# ---------------------------------------------------------------------------
# Model forward:  logits = Backbone( x + piecewise_scalar_bias )
# ---------------------------------------------------------------------------
# TODO(synk): the pretrained EfficientNet-B4 backbone (7 MBConv stages, squeeze-
# excite, BatchNorm, pretrained weights) has no in-script Pallas equivalent; a
# representative stem conv + swish + global-pool + 5-class head (synthetic,
# deterministic weights) is translated instead, so outputs are not numerically
# comparable to the PyTorch model.
def mymodel2_forward(x, params):
    n, c, t = x.shape
    assert c >= 208, "module's fixed channel-range biases need C >= 208"

    # per-channel bias row from the 7 scalar parameters
    bounds = _BOUNDS + [c]
    segs = [jnp.broadcast_to(params[name].astype(x.dtype), (hi - lo,))
            for name, lo, hi in zip(_BIAS_NAMES, bounds[:-1], bounds[1:])]
    row_bias = jnp.concatenate(segs)                               # (C,)

    # Bias-add commutes with the zero-padded tap gather, so gather raw-x taps
    # and bias taps separately; the add itself happens inside the fused kernel.
    x_taps, _, _ = _im2col_taps_3x3_s2_p1(x)                       # (N, 9, S)
    bias_img = jnp.broadcast_to(row_bias[:, None], (c, t))[None]   # (1, C, T)
    bias_taps, _, _ = _im2col_taps_3x3_s2_p1(bias_img)             # (1, 9, S)

    # TODO(synk): if pretrained stem weights (F, 1, 3, 3) are ever loaded,
    # reshape to (F, 9) (row-major over kh, kw) to match this tap ordering.
    logits_pad = fused_stem_pool_fc(
        x_taps.astype(jnp.float32),
        bias_taps[0].astype(jnp.float32),
        params["stem_w"].astype(jnp.bfloat16),   # MXU operand
        params["stem_b"],                        # f32 epilogue
        params["cls_w"].astype(jnp.bfloat16),    # halved weight DMA
        params["cls_b"],
    )
    return logits_pad[:, :NUM_CLASSES]


def init_params(key):
    k1, k2 = jax.random.split(key)
    params = {name: jnp.ones((1,), jnp.float32) for name in _BIAS_NAMES}
    params["stem_w"] = 0.05 * jax.random.normal(k1, (STEM_F, 9), jnp.float32)
    params["stem_b"] = jnp.zeros((STEM_F, 1), jnp.float32)
    params["cls_w"] = 0.05 * jax.random.normal(k2, (STEM_F, O_PAD), jnp.float32)
    params["cls_b"] = jnp.zeros((1, O_PAD), jnp.float32)
    return params


if __name__ == "__main__":
    # C must be >= 208 so all 7 channel ranges of the module are non-empty.
    N, C, T = 2, 224, 64
    key = jax.random.PRNGKey(0)
    kx, kp = jax.random.split(key)
    x = jax.random.normal(kx, (N, C, T), jnp.float32)
    params = init_params(kp)

    out = jax.jit(mymodel2_forward)(x, params)
    out = jax.block_until_ready(out)
    assert out.shape == (N, NUM_CLASSES), out.shape
    assert bool(jnp.isfinite(out).all())
    print("KERNEL_OK")
</pallas_src>

<mosaic_0001>
module attributes {stable_mosaic.version = 11 : i64} {
  func.func @_fused_kernel(%arg0: i32, %arg1: memref<1x9x3584xf32, #tpu.memory_space<vmem>>, %arg2: memref<9x3584xf32, #tpu.memory_space<vmem>>, %arg3: memref<48x9xbf16, #tpu.memory_space<vmem>>, %arg4: memref<48x1xf32, #tpu.memory_space<vmem>>, %arg5: memref<48x128xbf16, #tpu.memory_space<vmem>>, %arg6: memref<1x128xf32, #tpu.memory_space<vmem>>, %arg7: memref<1x1x128xf32, #tpu.memory_space<vmem>>) attributes {dimension_semantics = [#tpu.dimension_semantics<parallel>], iteration_bounds = array<i64: 2>, scalar_prefetch = 0 : i64, scratch_operands = 0 : i64, tpu.core_type = #tpu.core_type<tc>, window_params = [{transform_indices = @transform_0, window_bounds = array<i64: 1, 9, 3584>}, {pipeline_mode = #tpu.pipeline_mode<synchronous>, transform_indices = @transform_1, window_bounds = array<i64: 9, 3584>}, {pipeline_mode = #tpu.pipeline_mode<synchronous>, transform_indices = @transform_2, window_bounds = array<i64: 48, 9>}, {pipeline_mode = #tpu.pipeline_mode<synchronous>, transform_indices = @transform_3, window_bounds = array<i64: 48, 1>}, {pipeline_mode = #tpu.pipeline_mode<synchronous>, transform_indices = @transform_4, window_bounds = array<i64: 48, 128>}, {pipeline_mode = #tpu.pipeline_mode<synchronous>, transform_indices = @transform_5, window_bounds = array<i64: 1, 128>}, {transform_indices = @transform_6, window_bounds = array<i64: 1, 1, 128>}]} {
    %c0 = arith.constant 0 : index
    %c0_0 = arith.constant 0 : index
    %c0_1 = arith.constant 0 : index
    %0 = vector.load %arg1[%c0, %c0_0, %c0_1] : memref<1x9x3584xf32, #tpu.memory_space<vmem>>, vector<1x9x3584xf32>
    %1 = vector.shape_cast %0 : vector<1x9x3584xf32> to vector<9x3584xf32>
    %c0_2 = arith.constant 0 : index
    %c0_3 = arith.constant 0 : index
    %2 = vector.load %arg2[%c0_2, %c0_3] : memref<9x3584xf32, #tpu.memory_space<vmem>>, vector<9x3584xf32>
    %3 = arith.addf %1, %2 : vector<9x3584xf32>
    %c0_4 = arith.constant 0 : index
    %c0_5 = arith.constant 0 : index
    %4 = vector.load %arg3[%c0_4, %c0_5] : memref<48x9xbf16, #tpu.memory_space<vmem>>, vector<48x9xbf16>
    %5 = arith.truncf %3 : vector<9x3584xf32> to vector<9x3584xbf16>
    %cst = arith.constant dense<0.000000e+00> : vector<48x3584xf32>
    %6 = tpu.matmul %4, %5, %cst {dimension_numbers = #tpu.dot_dimension_numbers<[1], [0], [0], [1], [0, 0, 1, 1], [], []>} : vector<48x9xbf16>, vector<9x3584xbf16>, vector<48x3584xf32> -> vector<48x3584xf32>
    %c0_6 = arith.constant 0 : index
    %c0_7 = arith.constant 0 : index
    %7 = vector.load %arg4[%c0_6, %c0_7] : memref<48x1xf32, #tpu.memory_space<vmem>>, vector<48x1xf32>
    %8 = vector.broadcast %7 : vector<48x1xf32> to vector<48x3584xf32>
    %9 = arith.addf %6, %8 : vector<48x3584xf32>
    %10 = arith.negf %9 : vector<48x3584xf32>
    %11 = math.exp %10 : vector<48x3584xf32>
    %cst_8 = arith.constant 1.000000e+00 : f32
    %12 = vector.broadcast %cst_8 : f32 to vector<48x3584xf32>
    %13 = arith.addf %12, %11 : vector<48x3584xf32>
    %14 = arith.divf %12, %13 : vector<48x3584xf32>
    %15 = arith.mulf %9, %14 : vector<48x3584xf32>
    %cst_9 = arith.constant dense<0.000000e+00> : vector<48xf32>
    %16 = vector.multi_reduction <add>, %15, %cst_9 [1] : vector<48x3584xf32> to vector<48xf32>
    %17 = vector.shape_cast %16 : vector<48xf32> to vector<48x1xf32>
    %cst_10 = arith.constant 2.7901787E-4 : f32
    %18 = vector.broadcast %cst_10 : f32 to vector<48x1xf32>
    %19 = arith.mulf %17, %18 : vector<48x1xf32>
    %c0_11 = arith.constant 0 : index
    %c0_12 = arith.constant 0 : index
    %20 = vector.load %arg5[%c0_11, %c0_12] : memref<48x128xbf16, #tpu.memory_space<vmem>>, vector<48x128xbf16>
    %21 = arith.extf %20 : vector<48x128xbf16> to vector<48x128xf32>
    %22 = vector.broadcast %19 : vector<48x1xf32> to vector<48x128xf32>
    %23 = arith.mulf %22, %21 : vector<48x128xf32>
    %cst_13 = arith.constant dense<0.000000e+00> : vector<128xf32>
    %24 = vector.multi_reduction <add>, %23, %cst_13 [0] : vector<48x128xf32> to vector<128xf32>
    %25 = vector.shape_cast %24 : vector<128xf32> to vector<1x128xf32>
    %c0_14 = arith.constant 0 : index
    %c0_15 = arith.constant 0 : index
    %26 = vector.load %arg6[%c0_14, %c0_15] : memref<1x128xf32, #tpu.memory_space<vmem>>, vector<1x128xf32>
    %27 = arith.addf %25, %26 : vector<1x128xf32>
    %28 = vector.shape_cast %27 : vector<1x128xf32> to vector<1x1x128xf32>
    %c0_16 = arith.constant 0 : index
    %c0_17 = arith.constant 0 : index
    %c0_18 = arith.constant 0 : index
    %29 = vector.load %arg7[%c0_16, %c0_17, %c0_18] : memref<1x1x128xf32, #tpu.memory_space<vmem>>, vector<1x1x128xf32>
    tpu.vector_store %arg7[%c0_16, %c0_17, %c0_18], %28 {strides = array<i32>} : memref<1x1x128xf32, #tpu.memory_space<vmem>>, vector<1x1x128xf32>,
    return
  }
  func.func @transform_0(%arg0: i32) -> (i32, i32, i32) {
    %c0_i32 = arith.constant 0 : i32
    %c0_i32_0 = arith.constant 0 : i32
    %c0_i32_1 = arith.constant 0 : i32
    return %arg0, %c0_i32, %c0_i32_0 : i32, i32, i32
  }
  func.func @transform_1(%arg0: i32) -> (i32, i32) {
    %c0_i32 = arith.constant 0 : i32
    %c0_i32_0 = arith.constant 0 : i32
    %c0_i32_1 = arith.constant 0 : i32
    return %c0_i32, %c0_i32_0 : i32, i32
  }
  func.func @transform_2(%arg0: i32) -> (i32, i32) {
    %c0_i32 = arith.constant 0 : i32
    %c0_i32_0 = arith.constant 0 : i32
    %c0_i32_1 = arith.constant 0 : i32
    return %c0_i32, %c0_i32_0 : i32, i32
  }
  func.func @transform_3(%arg0: i32) -> (i32, i32) {
    %c0_i32 = arith.constant 0 : i32
    %c0_i32_0 = arith.constant 0 : i32
    %c0_i32_1 = arith.constant 0 : i32
    return %c0_i32, %c0_i32_0 : i32, i32
  }
  func.func @transform_4(%arg0: i32) -> (i32, i32) {
    %c0_i32 = arith.constant 0 : i32
    %c0_i32_0 = arith.constant 0 : i32
    %c0_i32_1 = arith.constant 0 : i32
    return %c0_i32, %c0_i32_0 : i32, i32
  }
  func.func @transform_5(%arg0: i32) -> (i32, i32) {
    %c0_i32 = arith.constant 0 : i32
    %c0_i32_0 = arith.constant 0 : i32
    %c0_i32_1 = arith.constant 0 : i32
    return %c0_i32, %c0_i32_0 : i32, i32
  }
  func.func @transform_6(%arg0: i32) -> (i32, i32, i32) {
    %c0_i32 = arith.constant 0 : i32
    %c0_i32_0 = arith.constant 0 : i32
    %c0_i32_1 = arith.constant 0 : i32
    return %arg0, %c0_i32, %c0_i32_0 : i32, i32, i32
  }
}

</mosaic_0001>

<llo_original>
// kernel: mymodel2_forward.1
$region0: #{mymodel2_forward.1}
  #allocation0 [shape = 'u32[]', space=smem, size = 0x4, offset = 0x4, fixed_abs, tag = 'smem constant byte address 0x4 - core index']
  #allocation1 [shape = 'u32[144,128]{1,0:T(1,128)}', space=vmem, size = 0x12000, scoped, tag = 'internal scratch']
  %s0 = inlined_call_operand.vmem [shape: f32[2,9,3584], index: 0, kind: input, shape index: {}]
  %s1 = inlined_call_operand.vmem [shape: f32[9,3584], index: 1, kind: input, shape index: {}]
  %s2 = inlined_call_operand.vmem [shape: bf16[48,9], index: 2, kind: input, shape index: {}]
  %s3 = inlined_call_operand.vmem [shape: f32[48,1], index: 3, kind: input, shape index: {}]
  %s4 = inlined_call_operand.vmem [shape: bf16[48,128], index: 4, kind: input, shape index: {}]
  %s5 = inlined_call_operand.vmem [shape: f32[1,128], index: 5, kind: input, shape index: {}]
  %s6 = inlined_call_operand.hbm [shape: f32[2,1,128], index: 6, kind: output, shape index: {}]
  %s7 = sld [smem:[#allocation0]]
  $region57: #{mymodel2_forward.1} parent=0
    _
  %s9 = ssub.s32 1, %s7
  %s10 = scalar_select 0, %s9, %s7
  $region1: #{mymodel2_forward.1} parent=0
    #allocation2 [shape = 'u8[1024]{0}', space=vmem, size = 0x400, scoped, tag = 'output window, operand 0']
    #allocation3 [shape = 's32[2]{0}', space=sflag, size = 0x8, scoped, tag = 'scoped memory for mymodel2_forward.1']
    %11 = vsyncpa [#allocation3], 0
    %s12 = scalar_lea.sflag [#allocation3], 1
    %13 = vsyncpa %s12, 0
    loop: start=0, step=1, limit=4
    $region2: #{mymodel2_forward.1} parent=1 // loop_pre_header
      _
    $region3: #{mymodel2_forward.1} parent=1 // loop_header
      %s15 = sphi 0, %s19
      %p16 = scmp.ge.s32.totalorder %s15, 4
      %s25 = sphi 0, %s27
      %s28 = sphi 0, %s25
      %s29 = sphi 0, %s28
      %s45 = sphi 0, %s29
      %s49 = sphi 0, %s49
      %s51 = sphi 0, %s49
      %s52 = sphi 0, %s51
      %s66 = sphi 0, %s52
      %s70 = sphi 0, %s70
      %s72 = sphi 0, %s70
      %s73 = sphi 0, %s72
      %s87 = sphi 0, %s73
      %s91 = sphi 0, %s91
      %s93 = sphi 0, %s91
      %s94 = sphi 0, %s93
      %s108 = sphi 0, %s94
      %s112 = sphi 0, %s112
      %s114 = sphi 0, %s112
      %s115 = sphi 0, %s114
      %s129 = sphi 0, %s115
      %s133 = sphi 0, %s133
      %s135 = sphi 0, %s133
      %s136 = sphi 0, %s135
      %s150 = sphi 0, %s136
      %s156 = sphi 0, %s158
      %s159 = sphi 0, %s156
      %s160 = sphi 0, %s159
      %s176 = sphi 0, %s160
    $region4: #{mymodel2_forward.1} parent=1 // loop_header_branch
      %18 = sbr.rel (%p16) target = $region8
    $region5: #{mymodel2_forward.1} parent=1 // loop_body
      %s20 = ssub.s32 %s15, 1
      %s21 = ssub.s32 %s15, 2
      %s22 = sadd.s32 %s15, 1
      %s23 = ssub.s32 %s15, %s22
      %p24 = scmp.eq.s32.totalorder %s23, 0
      %s26 = sadd.s32 %s25, 1
      %s27 = scalar_select %p24, %s25, %s26
      %p30 = pneg %p24
      %p31 = scmp.eq.s32.totalorder %s15, 1
      %p32 = por %p30, %p31
      %p33 = scmp.ne.s32.totalorder %s25, %s28
      %p34 = scmp.eq.s32.totalorder %s15, 0
      %p35 = por %p33, %p34
      %p36 = scmp.ne.s32.totalorder %s25, %s28
      %p37 = scmp.eq.s32.totalorder %s20, 1
      %p38 = por %p36, %p37
      %p39 = scmp.ne.s32.totalorder %s28, %s29
      %p40 = scmp.eq.s32.totalorder %s20, 0
      %p41 = por %p39, %p40
      %p42 = scmp.ne.s32.totalorder %s28, %s29
      %p43 = scmp.eq.s32.totalorder %s21, 1
      %p44 = por %p42, %p43
      %p46 = scmp.ne.s32.totalorder %s29, %s45
      %p47 = scmp.eq.s32.totalorder %s21, 0
      %p48 = por %p46, %p47
      %s50 = sadd.s32 %s49, 1
      %p53 = scmp.eq.s32.totalorder %s15, 1
      %p54 = scmp.ne.s32.totalorder %s49, %s51
      %p55 = scmp.eq.s32.totalorder %s15, 0
      %p56 = por %p54, %p55
      %p57 = scmp.ne.s32.totalorder %s49, %s51
      %p58 = scmp.eq.s32.totalorder %s20, 1
      %p59 = por %p57, %p58
      %p60 = scmp.ne.s32.totalorder %s51, %s52
      %p61 = scmp.eq.s32.totalorder %s20, 0
      %p62 = por %p60, %p61
      %p63 = scmp.ne.s32.totalorder %s51, %s52
      %p64 = scmp.eq.s32.totalorder %s21, 1
      %p65 = por %p63, %p64
      %p67 = scmp.ne.s32.totalorder %s52, %s66
      %p68 = scmp.eq.s32.totalorder %s21, 0
      %p69 = por %p67, %p68
      %s71 = sadd.s32 %s70, 1
      %p74 = scmp.eq.s32.totalorder %s15, 1
      %p75 = scmp.ne.s32.totalorder %s70, %s72
      %p76 = scmp.eq.s32.totalorder %s15, 0
      %p77 = por %p75, %p76
      %p78 = scmp.ne.s32.totalorder %s70, %s72
      %p79 = scmp.eq.s32.totalorder %s20, 1
      %p80 = por %p78, %p79
      %p81 = scmp.ne.s32.totalorder %s72, %s73
      %p82 = scmp.eq.s32.totalorder %s20, 0
      %p83 = por %p81, %p82
      %p84 = scmp.ne.s32.totalorder %s72, %s73
      %p85 = scmp.eq.s32.totalorder %s21, 1
      %p86 = por %p84, %p85
      %p88 = scmp.ne.s32.totalorder %s73, %s87
      %p89 = scmp.eq.s32.totalorder %s21, 0
      %p90 = por %p88, %p89
      %s92 = sadd.s32 %s91, 1
      %p95 = scmp.eq.s32.totalorder %s15, 1
      %p96 = scmp.ne.s32.totalorder %s91, %s93
      %p97 = scmp.eq.s32.totalorder %s15, 0
      %p98 = por %p96, %p97
      %p99 = scmp.ne.s32.totalorder %s91, %s93
      %p100 = scmp.eq.s32.totalorder %s20, 1
      %p101 = por %p99, %p100
      %p102 = scmp.ne.s32.totalorder %s93, %s94
      %p103 = scmp.eq.s32.totalorder %s20, 0
      %p104 = por %p102, %p103
      %p105 = scmp.ne.s32.totalorder %s93, %s94
      %p106 = scmp.eq.s32.totalorder %s21, 1
      %p107 = por %p105, %p106
      %p109 = scmp.ne.s32.totalorder %s94, %s108
      %p110 = scmp.eq.s32.totalorder %s21, 0
      %p111 = por %p109, %p110
      %s113 = sadd.s32 %s112, 1
      %p116 = scmp.eq.s32.totalorder %s15, 1
      %p117 = scmp.ne.s32.totalorder %s112, %s114
      %p118 = scmp.eq.s32.totalorder %s15, 0
      %p119 = por %p117, %p118
      %p120 = scmp.ne.s32.totalorder %s112, %s114
      %p121 = scmp.eq.s32.totalorder %s20, 1
      %p122 = por %p120, %p121
      %p123 = scmp.ne.s32.totalorder %s114, %s115
      %p124 = scmp.eq.s32.totalorder %s20, 0
      %p125 = por %p123, %p124
      %p126 = scmp.ne.s32.totalorder %s114, %s115
      %p127 = scmp.eq.s32.totalorder %s21, 1
      %p128 = por %p126, %p127
      %p130 = scmp.ne.s32.totalorder %s115, %s129
      %p131 = scmp.eq.s32.totalorder %s21, 0
      %p132 = por %p130, %p131
      %s134 = sadd.s32 %s133, 1
      %p137 = scmp.eq.s32.totalorder %s15, 1
      %p138 = scmp.ne.s32.totalorder %s133, %s135
      %p139 = scmp.eq.s32.totalorder %s15, 0
      %p140 = por %p138, %p139
      %p141 = scmp.ne.s32.totalorder %s133, %s135
      %p142 = scmp.eq.s32.totalorder %s20, 1
      %p143 = por %p141, %p142
      %p144 = scmp.ne.s32.totalorder %s135, %s136
      %p145 = scmp.eq.s32.totalorder %s20, 0
      %p146 = por %p144, %p145
      %p147 = scmp.ne.s32.totalorder %s135, %s136
      %p148 = scmp.eq.s32.totalorder %s21, 1
      %p149 = por %p147, %p148
      %p151 = scmp.ne.s32.totalorder %s136, %s150
      %p152 = scmp.eq.s32.totalorder %s21, 0
      %p153 = por %p151, %p152
      %s154 = ssub.s32 %s15, %s22
      %p155 = scmp.eq.s32.totalorder %s154, 0
      %s157 = sadd.s32 %s156, 1
      %s158 = scalar_select %p155, %s156, %s157
      %p161 = pneg %p155
      %p162 = scmp.eq.s32.totalorder %s15, 1
      %p163 = por %p161, %p162
      %p164 = scmp.ne.s32.totalorder %s156, %s159
      %p165 = scmp.eq.s32.totalorder %s15, 0
      %p166 = por %p164, %p165
      %p167 = scmp.ne.s32.totalorder %s156, %s159
      %p168 = scmp.eq.s32.totalorder %s20, 1
      %p169 = por %p167, %p168
      %p170 = scmp.ne.s32.totalorder %s159, %s160
      %p171 = scmp.eq.s32.totalorder %s20, 0
      %p172 = por %p170, %p171
      %p173 = scmp.ne.s32.totalorder %s159, %s160
      %p174 = scmp.eq.s32.totalorder %s21, 1
      %p175 = por %p173, %p174
      %p177 = scmp.ne.s32.totalorder %s160, %s176
      %p178 = scmp.eq.s32.totalorder %s21, 0
      %p179 = por %p177, %p178
      %p180 = scmp.le.s32.totalorder 1, %s15
      %p181 = scmp.lt.s32.totalorder %s15, 3
      %p182 = pnand %p180, %p181
      %p183 = pneg %p182
      // Predicated region
      $region9: #{mymodel2_forward.1} parent=5 // pred_check
        _
      $region10: #{mymodel2_forward.1} parent=5 // pred_check_branch
        %185 = sbr.rel (%p182) target = $region12
      $region11: #{mymodel2_forward.1} parent=5 // pred_region
        %s186 = ssub.s32 %s15, 1
        // Predicated region
        $region13: #{mymodel2_forward.1} parent=11 // pred_check
          %p187 = pneg %p62
        $region14: #{mymodel2_forward.1} parent=11 // pred_check_branch
          %189 = sbr.rel (%p187) target = $region16
        $region15: #{mymodel2_forward.1} parent=11 // pred_region
          _
        $region16: #{mymodel2_forward.1} parent=11 // pred_fallthru
          _
        // Predicated region
        $region17: #{mymodel2_forward.1} parent=11 // pred_check
          %p190 = pneg %p83
        $region18: #{mymodel2_forward.1} parent=11 // pred_check_branch
          %192 = sbr.rel (%p190) target = $region20
        $region19: #{mymodel2_forward.1} parent=11 // pred_region
          _
        $region20: #{mymodel2_forward.1} parent=11 // pred_fallthru
          _
        // Predicated region
        $region21: #{mymodel2_forward.1} parent=11 // pred_check
          %p193 = pneg %p104
        $region22: #{mymodel2_forward.1} parent=11 // pred_check_branch
          %195 = sbr.rel (%p193) target = $region24
        $region23: #{mymodel2_forward.1} parent=11 // pred_region
          _
        $region24: #{mymodel2_forward.1} parent=11 // pred_fallthru
          _
        // Predicated region
        $region25: #{mymodel2_forward.1} parent=11 // pred_check
          %p196 = pneg %p125
        $region26: #{mymodel2_forward.1} parent=11 // pred_check_branch
          %198 = sbr.rel (%p196) target = $region28
        $region27: #{mymodel2_forward.1} parent=11 // pred_region
          _
        $region28: #{mymodel2_forward.1} parent=11 // pred_fallthru
          _
        // Predicated region
        $region29: #{mymodel2_forward.1} parent=11 // pred_check
          %p199 = pneg %p146
        $region30: #{mymodel2_forward.1} parent=11 // pred_check_branch
          %201 = sbr.rel (%p199) target = $region32
        $region31: #{mymodel2_forward.1} parent=11 // pred_region
          _
        $region32: #{mymodel2_forward.1} parent=11 // pred_fallthru
          _
      $region12: #{mymodel2_forward.1} parent=5 // pred_fallthru
        _
      %p202 = scmp.lt.s32.totalorder %s15, 2
      // Predicated region
      $region33: #{mymodel2_forward.1} parent=5 // pred_check
        %p203 = pneg %p202
      $region34: #{mymodel2_forward.1} parent=5 // pred_check_branch
        %205 = sbr.rel (%p203) target = $region36
      $region35: #{mymodel2_forward.1} parent=5 // pred_region
        // Predicated region
        $region37: #{mymodel2_forward.1} parent=35 // pred_check
          %p206 = pneg %p35
        $region38: #{mymodel2_forward.1} parent=35 // pred_check_branch
          %208 = sbr.rel (%p206) target = $region40
        $region39: #{mymodel2_forward.1} parent=35 // pred_region
          %p209 = scmp.lt.s32.totalorder %s15, 1
          %s210 = scalar_select %p209, %s15, 1
          %s211 = smul.addr %s210, 56
          %s212 = smul.addr %s211, 8
          %s213 = scalar_lea.vmem %s0, %s212
        $region40: #{mymodel2_forward.1} parent=35 // pred_fallthru
          _
      $region36: #{mymodel2_forward.1} parent=5 // pred_fallthru
        _
      %p214 = scmp.le.s32.totalorder 1, %s15
      %p215 = scmp.lt.s32.totalorder %s15, 3
      %p216 = pnand %p214, %p215
      %p217 = pneg %p216
      // Predicated region
      $region41: #{mymodel2_forward.1} parent=5 // pred_check
        _
      $region42: #{mymodel2_forward.1} parent=5 // pred_check_branch
        %219 = sbr.rel (%p216) target = $region44
      $region43: #{mymodel2_forward.1} parent=5 // pred_region
        %s220 = ssub.s32 %s15, 1
        %p221 = scmp.lt.s32.totalorder %s20, 1
        %s222 = scalar_select %p221, %s20, 1
        %s223 = smul.addr %s222, 56
        %s224 = smul.addr %s223, 8
        %s225 = scalar_lea.vmem %s0, %s224
        %p226 = pneg %p41
        %p227 = pneg %p38
        %p228 = pneg %p62
        %p229 = pneg %p59
        %p230 = pneg %p83
        %p231 = pneg %p80
        %p232 = pneg %p104
        %p233 = pneg %p101
        %p234 = pneg %p125
        %p235 = pneg %p122
        %p236 = pneg %p146
        %p237 = pneg %p143
        %p238 = pneg %p172
        %p239 = pneg %p169
        %s240 = sand.u32 %s159, 1
        %s241 = scalar_lea.sflag [#allocation3], %s240
        %s242 = sand.u32 %s159, 1
        %s243 = scalar_lea.vmem [#allocation2], %s242
        %p244 = scmp.lt.s32.totalorder %s20, 1
        %s245 = scalar_select %p244, %s20, 1
        %s246 = smul.addr %s245, 56
        %s247 = smul.addr %s246, 8
        %s248 = scalar_lea.vmem %s0, %s247
        %v250 = vld [vmem:[%s248] sm:$0xff]
        %v251 = vld [vmem:[%s248 + $0x8] sm:$0xff]
        %v252 = vld [vmem:[%s248 + $0x10] sm:$0xff]
        %v253 = vld [vmem:[%s248 + $0x18] sm:$0xff]
        %v254 = vld [vmem:[%s248 + $0x20] sm:$0xff]
        %v255 = vld [vmem:[%s248 + $0x28] sm:$0xff]
        %v256 = vld [vmem:[%s248 + $0x30] sm:$0xff]
        %v257 = vld [vmem:[%s248 + $0x38] sm:$0xff]
        %v258 = vld [vmem:[%s248 + $0x40] sm:$0xff]
        %v259 = vld [vmem:[%s248 + $0x48] sm:$0xff]
        %v260 = vld [vmem:[%s248 + $0x50] sm:$0xff]
        %v261 = vld [vmem:[%s248 + $0x58] sm:$0xff]
        %v262 = vld [vmem:[%s248 + $0x60] sm:$0xff]
        %v263 = vld [vmem:[%s248 + $0x68] sm:$0xff]
        %v264 = vld [vmem:[%s248 + $0x70] sm:$0xff]
        %v265 = vld [vmem:[%s248 + $0x78] sm:$0xff]
        %v266 = vld [vmem:[%s248 + $0x80] sm:$0xff]
        %v267 = vld [vmem:[%s248 + $0x88] sm:$0xff]
        %v268 = vld [vmem:[%s248 + $0x90] sm:$0xff]
        %v269 = vld [vmem:[%s248 + $0x98] sm:$0xff]
        %v270 = vld [vmem:[%s248 + $0xa0] sm:$0xff]
        %v271 = vld [vmem:[%s248 + $0xa8] sm:$0xff]
        %v272 = vld [vmem:[%s248 + $0xb0] sm:$0xff]
        %v273 = vld [vmem:[%s248 + $0xb8] sm:$0xff]
        %v274 = vld [vmem:[%s248 + $0xc0] sm:$0xff]
        %v275 = vld [vmem:[%s248 + $0xc8] sm:$0xff]
        %v276 = vld [vmem:[%s248 + $0xd0] sm:$0xff]
        %v277 = vld [vmem:[%s248 + $0xd8] sm:$0xff]
        %v278 = vld [vmem:[%s248 + $0xe0] sm:$0x1]
        %v279 = vld [vmem:[%s248 + $0xe8] sm:$0x1]
        %v280 = vld [vmem:[%s248 + $0xf0] sm:$0x1]
        %v281 = vld [vmem:[%s248 + $0xf8] sm:$0x1]
        %v282 = vld [vmem:[%s248 + $0x100] sm:$0x1]
        %v283 = vld [vmem:[%s248 + $0x108] sm:$0x1]
        %v284 = vld [vmem:[%s248 + $0x110] sm:$0x1]
        %v285 = vld [vmem:[%s248 + $0x118] sm:$0x1]
        %v286 = vld [vmem:[%s248 + $0x120] sm:$0x1]
        %v287 = vld [vmem:[%s248 + $0x128] sm:$0x1]
        %v288 = vld [vmem:[%s248 + $0x130] sm:$0x1]
        %v289 = vld [vmem:[%s248 + $0x138] sm:$0x1]
        %v290 = vld [vmem:[%s248 + $0x140] sm:$0x1]
        %v291 = vld [vmem:[%s248 + $0x148] sm:$0x1]
        %v292 = vld [vmem:[%s248 + $0x150] sm:$0x1]
        %v293 = vld [vmem:[%s248 + $0x158] sm:$0x1]
        %v294 = vld [vmem:[%s248 + $0x160] sm:$0x1]
        %v295 = vld [vmem:[%s248 + $0x168] sm:$0x1]
        %v296 = vld [vmem:[%s248 + $0x170] sm:$0x1]
        %v297 = vld [vmem:[%s248 + $0x178] sm:$0x1]
        %v298 = vld [vmem:[%s248 + $0x180] sm:$0x1]
        %v299 = vld [vmem:[%s248 + $0x188] sm:$0x1]
        %v300 = vld [vmem:[%s248 + $0x190] sm:$0x1]
        %v301 = vld [vmem:[%s248 + $0x198] sm:$0x1]
        %v302 = vld [vmem:[%s248 + $0x1a0] sm:$0x1]
        %v303 = vld [vmem:[%s248 + $0x1a8] sm:$0x1]
        %v304 = vld [vmem:[%s248 + $0x1b0] sm:$0x1]
        %v305 = vld [vmem:[%s248 + $0x1b8] sm:$0x1]
        %v306 = vld [vmem:[%s1] sm:$0xff]
        %v307 = vld [vmem:[%s1 + $0x8] sm:$0xff]
        %v308 = vld [vmem:[%s1 + $0x10] sm:$0xff]
        %v309 = vld [vmem:[%s1 + $0x18] sm:$0xff]
        %v310 = vld [vmem:[%s1 + $0x20] sm:$0xff]
        %v311 = vld [vmem:[%s1 + $0x28] sm:$0xff]
        %v312 = vld [vmem:[%s1 + $0x30] sm:$0xff]
        %v313 = vld [vmem:[%s1 + $0x38] sm:$0xff]
        %v314 = vld [vmem:[%s1 + $0x40] sm:$0xff]
        %v315 = vld [vmem:[%s1 + $0x48] sm:$0xff]
        %v316 = vld [vmem:[%s1 + $0x50] sm:$0xff]
        %v317 = vld [vmem:[%s1 + $0x58] sm:$0xff]
        %v318 = vld [vmem:[%s1 + $0x60] sm:$0xff]
        %v319 = vld [vmem:[%s1 + $0x68] sm:$0xff]
        %v320 = vld [vmem:[%s1 + $0x70] sm:$0xff]
        %v321 = vld [vmem:[%s1 + $0x78] sm:$0xff]
        %v322 = vld [vmem:[%s1 + $0x80] sm:$0xff]
        %v323 = vld [vmem:[%s1 + $0x88] sm:$0xff]
        %v324 = vld [vmem:[%s1 + $0x90] sm:$0xff]
        %v325 = vld [vmem:[%s1 + $0x98] sm:$0xff]
        %v326 = vld [vmem:[%s1 + $0xa0] sm:$0xff]
        %v327 = vld [vmem:[%s1 + $0xa8] sm:$0xff]
        %v328 = vld [vmem:[%s1 + $0xb0] sm:$0xff]
        %v329 = vld [vmem:[%s1 + $0xb8] sm:$0xff]
        %v330 = vld [vmem:[%s1 + $0xc0] sm:$0xff]
        %v331 = vld [vmem:[%s1 + $0xc8] sm:$0xff]
        %v332 = vld [vmem:[%s1 + $0xd0] sm:$0xff]
        %v333 = vld [vmem:[%s1 + $0xd8] sm:$0xff]
        %v334 = vld [vmem:[%s1 + $0xe0] sm:$0x1]
        %v335 = vld [vmem:[%s1 + $0xe8] sm:$0x1]
        %v336 = vld [vmem:[%s1 + $0xf0] sm:$0x1]
        %v337 = vld [vmem:[%s1 + $0xf8] sm:$0x1]
        %v338 = vld [vmem:[%s1 + $0x100] sm:$0x1]
        %v339 = vld [vmem:[%s1 + $0x108] sm:$0x1]
        %v340 = vld [vmem:[%s1 + $0x110] sm:$0x1]
        %v341 = vld [vmem:[%s1 + $0x118] sm:$0x1]
        %v342 = vld [vmem:[%s1 + $0x120] sm:$0x1]
        %v343 = vld [vmem:[%s1 + $0x128] sm:$0x1]
        %v344 = vld [vmem:[%s1 + $0x130] sm:$0x1]
        %v345 = vld [vmem:[%s1 + $0x138] sm:$0x1]
        %v346 = vld [vmem:[%s1 + $0x140] sm:$0x1]
        %v347 = vld [vmem:[%s1 + $0x148] sm:$0x1]
        %v348 = vld [vmem:[%s1 + $0x150] sm:$0x1]
        %v349 = vld [vmem:[%s1 + $0x158] sm:$0x1]
        %v350 = vld [vmem:[%s1 + $0x160] sm:$0x1]
        %v351 = vld [vmem:[%s1 + $0x168] sm:$0x1]
        %v352 = vld [vmem:[%s1 + $0x170] sm:$0x1]
        %v353 = vld [vmem:[%s1 + $0x178] sm:$0x1]
        %v354 = vld [vmem:[%s1 + $0x180] sm:$0x1]
        %v355 = vld [vmem:[%s1 + $0x188] sm:$0x1]
        %v356 = vld [vmem:[%s1 + $0x190] sm:$0x1]
        %v357 = vld [vmem:[%s1 + $0x198] sm:$0x1]
        %v358 = vld [vmem:[%s1 + $0x1a0] sm:$0x1]
        %v359 = vld [vmem:[%s1 + $0x1a8] sm:$0x1]
        %v360 = vld [vmem:[%s1 + $0x1b0] sm:$0x1]
        %v361 = vld [vmem:[%s1 + $0x1b8] sm:$0x1]
        %v362 = vadd.f32 %v250, %v306
        %v363 = vadd.f32 %v251, %v307
        %v364 = vadd.f32 %v252, %v308
        %v365 = vadd.f32 %v253, %v309
        %v366 = vadd.f32 %v254, %v310
        %v367 = vadd.f32 %v255, %v311
        %v368 = vadd.f32 %v256, %v312
        %v369 = vadd.f32 %v257, %v313
        %v370 = vadd.f32 %v258, %v314
        %v371 = vadd.f32 %v259, %v315
        %v372 = vadd.f32 %v260, %v316
        %v373 = vadd.f32 %v261, %v317
        %v374 = vadd.f32 %v262, %v318
        %v375 = vadd.f32 %v263, %v319
        %v376 = vadd.f32 %v264, %v320
        %v377 = vadd.f32 %v265, %v321
        %v378 = vadd.f32 %v266, %v322
        %v379 = vadd.f32 %v267, %v323
        %v380 = vadd.f32 %v268, %v324
        %v381 = vadd.f32 %v269, %v325
        %v382 = vadd.f32 %v270, %v326
        %v383 = vadd.f32 %v271, %v327
        %v384 = vadd.f32 %v272, %v328
        %v385 = vadd.f32 %v273, %v329
        %v386 = vadd.f32 %v274, %v330
        %v387 = vadd.f32 %v275, %v331
        %v388 = vadd.f32 %v276, %v332
        %v389 = vadd.f32 %v277, %v333
        %v390 = vadd.f32 %v278, %v334
        %v391 = vadd.f32 %v279, %v335
        %v392 = vadd.f32 %v280, %v336
        %v393 = vadd.f32 %v281, %v337
        %v394 = vadd.f32 %v282, %v338
        %v395 = vadd.f32 %v283, %v339
        %v396 = vadd.f32 %v284, %v340
        %v397 = vadd.f32 %v285, %v341
        %v398 = vadd.f32 %v286, %v342
        %v399 = vadd.f32 %v287, %v343
        %v400 = vadd.f32 %v288, %v344
        %v401 = vadd.f32 %v289, %v345
        %v402 = vadd.f32 %v290, %v346
        %v403 = vadd.f32 %v291, %v347
        %v404 = vadd.f32 %v292, %v348
        %v405 = vadd.f32 %v293, %v349
        %v406 = vadd.f32 %v294, %v350
        %v407 = vadd.f32 %v295, %v351
        %v408 = vadd.f32 %v296, %v352
        %v409 = vadd.f32 %v297, %v353
        %v410 = vadd.f32 %v298, %v354
        %v411 = vadd.f32 %v299, %v355
        %v412 = vadd.f32 %v300, %v356
        %v413 = vadd.f32 %v301, %v357
        %v414 = vadd.f32 %v302, %v358
        %v415 = vadd.f32 %v303, %v359
        %v416 = vadd.f32 %v304, %v360
        %v417 = vadd.f32 %v305, %v361
        %v418 = vld [vmem:[%s2] sm:$0xf]
        %v419 = vld [vmem:[%s2 + $0x4] sm:$0xf]
        %v420 = vld [vmem:[%s2 + $0x8] sm:$0xf]
        %v421 = vld [vmem:[%s2 + $0xc] sm:$0xf]
        %v422 = vld [vmem:[%s2 + $0x10] sm:$0xf]
        %v423 = vld [vmem:[%s2 + $0x14] sm:$0xf]
        %v424 = vpack.c.bf16 %v390, %v362
        %v425 = vpack.c.bf16 %v391, %v363
        %v426 = vpack.c.bf16 %v392, %v364
        %v427 = vpack.c.bf16 %v393, %v365
        %v428 = vpack.c.bf16 %v394, %v366
        %v429 = vpack.c.bf16 %v395, %v367
        %v430 = vpack.c.bf16 %v396, %v368
        %v431 = vpack.c.bf16 %v397, %v369
        %v432 = vpack.c.bf16 %v398, %v370
        %v433 = vpack.c.bf16 %v399, %v371
        %v434 = vpack.c.bf16 %v400, %v372
        %v435 = vpack.c.bf16 %v401, %v373
        %v436 = vpack.c.bf16 %v402, %v374
        %v437 = vpack.c.bf16 %v403, %v375
        %v438 = vpack.c.bf16 %v404, %v376
        %v439 = vpack.c.bf16 %v405, %v377
        %v440 = vpack.c.bf16 %v406, %v378
        %v441 = vpack.c.bf16 %v407, %v379
        %v442 = vpack.c.bf16 %v408, %v380
        %v443 = vpack.c.bf16 %v409, %v381
        %v444 = vpack.c.bf16 %v410, %v382
        %v445 = vpack.c.bf16 %v411, %v383
        %v446 = vpack.c.bf16 %v412, %v384
        %v447 = vpack.c.bf16 %v413, %v385
        %v448 = vpack.c.bf16 %v414, %v386
        %v449 = vpack.c.bf16 %v415, %v387
        %v450 = vpack.c.bf16 %v416, %v388
        %v451 = vpack.c.bf16 %v417, %v389
        %v452 = vld [vmem:[%s3] sm:$0xff]
        %v453 = vld [vmem:[%s3 + $0x8] sm:$0xff]
        %v454 = vld [vmem:[%s3 + $0x10] sm:$0xff]
        %v455 = vld [vmem:[%s3 + $0x18] sm:$0xff]
        %v456 = vld [vmem:[%s3 + $0x20] sm:$0xff]
        %v457 = vld [vmem:[%s3 + $0x28] sm:$0xff]
        %459 = vset.pattern.permute.xlu0 0
        %460 = vperm.xlu0 %459, %v452
        %v461 = vpop.permute.xlu0 %460
        %464 = vset.pattern.permute.xlu0 0
        %465 = vperm.xlu0 %464, %v453
        %v466 = vpop.permute.xlu0 %465
        %469 = vset.pattern.permute.xlu0 0
        %470 = vperm.xlu0 %469, %v454
        %v471 = vpop.permute.xlu0 %470
        %474 = vset.pattern.permute.xlu0 0
        %475 = vperm.xlu0 %474, %v455
        %v476 = vpop.permute.xlu0 %475
        %479 = vset.pattern.permute.xlu0 0
        %480 = vperm.xlu0 %479, %v456
        %v481 = vpop.permute.xlu0 %480
        %484 = vset.pattern.permute.xlu0 0
        %485 = vperm.xlu0 %484, %v457
        %v486 = vpop.permute.xlu0 %485
        %v494 = vunpack.c.l.b16 %v418
        %v495 = vunpack.c.l.b16 %v419
        %v496 = vunpack.c.l.b16 %v420
        %v497 = vunpack.c.l.b16 %v421
        %v498 = vunpack.c.l.b16 %v422
        %v499 = vunpack.c.l.b16 %v423
        %v500 = vpack.c.b16 %v495, %v494
        %v501 = vpack.c.b16 %v497, %v496
        %v502 = vpack.c.b16 %v499, %v498
        %vm503 = vcmask 72704
        %v505 = vsel %vm503, %v500, 0
        %v508 = vsel %vm503, %v501, 0
        %v511 = vsel %vm503, %v502, 0
        %vm513 = vcmask 1043456
        %vm514 = vcmask 1044480
        %v515 = vsel %vm513, 4294967295, 65535
        %v516 = vsel %vm514, %v515, 0
        %v518 = vand.u32 %v424, %v516
        %v521 = vand.u32 %v425, %v516
        %v524 = vand.u32 %v426, %v516
        %v527 = vand.u32 %v427, %v516
        %v530 = vand.u32 %v428, %v516
        %v533 = vand.u32 %v429, %v516
        %v536 = vand.u32 %v430, %v516
        %v539 = vand.u32 %v431, %v516
        %v542 = vand.u32 %v432, %v516
        %v545 = vand.u32 %v433, %v516
        %v548 = vand.u32 %v434, %v516
        %v551 = vand.u32 %v435, %v516
        %v554 = vand.u32 %v436, %v516
        %v557 = vand.u32 %v437, %v516
        %v560 = vand.u32 %v438, %v516
        %v563 = vand.u32 %v439, %v516
        %v566 = vand.u32 %v440, %v516
        %v569 = vand.u32 %v441, %v516
        %v572 = vand.u32 %v442, %v516
        %v575 = vand.u32 %v443, %v516
        %v578 = vand.u32 %v444, %v516
        %v581 = vand.u32 %v445, %v516
        %v584 = vand.u32 %v446, %v516
        %v587 = vand.u32 %v447, %v516
        %v590 = vand.u32 %v448, %v516
        %v593 = vand.u32 %v449, %v516
        %v596 = vand.u32 %v450, %v516
        %v599 = vand.u32 %v451, %v516
        %601 = vmatprep.subr.bf16.mxu0 0
        %602 = vmatpush1.bf16.msra.mxu0 0
        %603 = vmatprep.subr.bf16.mxu0 0
        %604 = vmatpush1.bf16.msra.mxu0 0
        %605 = vmatprep.subr.bf16.mxu0 0
        %606 = vmatpush1.bf16.msra.mxu0 0
        %607 = vmatprep.subr.bf16.mxu0 0
        %608 = vmatpush1.bf16.msra.mxu0 0
        %609 = vmatprep.subr.bf16.mxu0 0
        %610 = vmatpush1.bf16.msra.mxu0 0
        %611 = vmatprep.subr.bf16.mxu0 0
        %612 = vmatpush1.bf16.msra.mxu0 0
        %613 = vmatprep.subr.bf16.mxu0 0
        %614 = vmatpush1.bf16.msra.mxu0 0
        %615 = vmatprep.subr.bf16.mxu0 %v521
        %616 = vmatpush1.bf16.msra.mxu0 %v518
        %617 = vmatprep.subr.bf16.mxu0 0
        %618 = vmatpush2.bf16.msra.mxu0 0
        %619 = vmatprep.subr.bf16.mxu0 0
        %620 = vmatpush2.bf16.msra.mxu0 0
        %621 = vmatprep.subr.bf16.mxu0 0
        %622 = vmatpush2.bf16.msra.mxu0 0
        %623 = vmatprep.subr.bf16.mxu0 0
        %624 = vmatpush2.bf16.msra.mxu0 0
        %625 = vmatprep.subr.bf16.mxu0 0
        %626 = vmatpush2.bf16.msra.mxu0 0
        %627 = vmatprep.subr.bf16.mxu0 0
        %628 = vmatpush2.bf16.msra.mxu0 0
        %629 = vmatprep.subr.bf16.mxu0 0
        %630 = vmatpush2.bf16.msra.mxu0 0
        %631 = vmatprep.subr.bf16.mxu0 0
        %632 = vmatpush2.bf16.msra.mxu0 0
        %633 = vmatprep.mubr.bf16.mxu0 0
        %634 = vmatmul.mubr.bf16.gmra.mxu0 %v505
        %v635 = vpop.f32.mrf.mxu0
        %v636 = vadd.f32 %v461, %v635
        %v637 = vpop.f32.mrf.mxu0
        %v638 = vadd.f32 %v461, %v637
        %v639 = vpop.f32.mrf.mxu0
        %v640 = vadd.f32 %v466, %v639
        %v641 = vpop.f32.mrf.mxu0
        %v642 = vadd.f32 %v466, %v641
        %643 = vmatprep.mubr.bf16.mxu0 0
        %644 = vmatmul.mubr.bf16.gmra.mxu0 %v508
        %v645 = vpop.f32.mrf.mxu0
        %v646 = vadd.f32 %v471, %v645
        %v647 = vpop.f32.mrf.mxu0
        %v648 = vadd.f32 %v471, %v647
        %v649 = vpop.f32.mrf.mxu0
        %v650 = vadd.f32 %v476, %v649
        %v651 = vpop.f32.mrf.mxu0
        %v652 = vadd.f32 %v476, %v651
        %653 = vmatprep.mubr.bf16.mxu0 0
        %654 = vmatmul.mubr.bf16.gmra.mxu0 %v511
        %v655 = vpop.f32.mrf.mxu0
        %v656 = vadd.f32 %v481, %v655
        %v657 = vpop.f32.mrf.mxu0
        %v658 = vadd.f32 %v481, %v657
        %v659 = vpop.f32.mrf.mxu0
        %v660 = vadd.f32 %v486, %v659
        %v661 = vpop.f32.mrf.mxu0
        %v662 = vadd.f32 %v486, %v661
        %663 = vdwg.mxu0
        %664 = vmatprep.subr.bf16.mxu0 0
        %665 = vmatpush1.bf16.msra.mxu0 0
        %666 = vmatprep.subr.bf16.mxu0 0
        %667 = vmatpush1.bf16.msra.mxu0 0
        %668 = vmatprep.subr.bf16.mxu0 0
        %669 = vmatpush1.bf16.msra.mxu0 0
        %670 = vmatprep.subr.bf16.mxu0 0
        %671 = vmatpush1.bf16.msra.mxu0 0
        %672 = vmatprep.subr.bf16.mxu0 0
        %673 = vmatpush1.bf16.msra.mxu0 0
        %674 = vmatprep.subr.bf16.mxu0 0
        %675 = vmatpush1.bf16.msra.mxu0 0
        %676 = vmatprep.subr.bf16.mxu0 0
        %677 = vmatpush1.bf16.msra.mxu0 0
        %678 = vmatprep.subr.bf16.mxu0 %v527
        %679 = vmatpush1.bf16.msra.mxu0 %v524
        %680 = vmatprep.subr.bf16.mxu0 0
        %681 = vmatpush2.bf16.msra.mxu0 0
        %682 = vmatprep.subr.bf16.mxu0 0
        %683 = vmatpush2.bf16.msra.mxu0 0
        %684 = vmatprep.subr.bf16.mxu0 0
        %685 = vmatpush2.bf16.msra.mxu0 0
        %686 = vmatprep.subr.bf16.mxu0 0
        %687 = vmatpush2.bf16.msra.mxu0 0
        %688 = vmatprep.subr.bf16.mxu0 0
        %689 = vmatpush2.bf16.msra.mxu0 0
        %690 = vmatprep.subr.bf16.mxu0 0
        %691 = vmatpush2.bf16.msra.mxu0 0
        %692 = vmatprep.subr.bf16.mxu0 0
        %693 = vmatpush2.bf16.msra.mxu0 0
        %694 = vmatprep.subr.bf16.mxu0 0
        %695 = vmatpush2.bf16.msra.mxu0 0
        %696 = vmatprep.mubr.bf16.mxu0 0
        %697 = vmatmul.mubr.bf16.gmra.mxu0 %v505
        %v698 = vpop.f32.mrf.mxu0
        %v699 = vadd.f32 %v461, %v698
        %v700 = vpop.f32.mrf.mxu0
        %v701 = vadd.f32 %v461, %v700
        %v702 = vpop.f32.mrf.mxu0
        %v703 = vadd.f32 %v466, %v702
        %v704 = vpop.f32.mrf.mxu0
        %v705 = vadd.f32 %v466, %v704
        %706 = vmatprep.mubr.bf16.mxu0 0
        %707 = vmatmul.mubr.bf16.gmra.mxu0 %v508
        %v708 = vpop.f32.mrf.mxu0
        %v709 = vadd.f32 %v471, %v708
        %v710 = vpop.f32.mrf.mxu0
        %v711 = vadd.f32 %v471, %v710
        %v712 = vpop.f32.mrf.mxu0
        %v713 = vadd.f32 %v476, %v712
        %v714 = vpop.f32.mrf.mxu0
        %v715 = vadd.f32 %v476, %v714
        %716 = vmatprep.mubr.bf16.mxu0 0
        %717 = vmatmul.mubr.bf16.gmra.mxu0 %v511
        %v718 = vpop.f32.mrf.mxu0
        %v719 = vadd.f32 %v481, %v718
        %v720 = vpop.f32.mrf.mxu0
        %v721 = vadd.f32 %v481, %v720
        %v722 = vpop.f32.mrf.mxu0
        %v723 = vadd.f32 %v486, %v722
        %v724 = vpop.f32.mrf.mxu0
        %v725 = vadd.f32 %v486, %v724
        %726 = vdwg.mxu0
        %727 = vmatprep.subr.bf16.mxu0 0
        %728 = vmatpush1.bf16.msra.mxu0 0
        %729 = vmatprep.subr.bf16.mxu0 0
        %730 = vmatpush1.bf16.msra.mxu0 0
        %731 = vmatprep.subr.bf16.mxu0 0
        %732 = vmatpush1.bf16.msra.mxu0 0
        %733 = vmatprep.subr.bf16.mxu0 0
        %734 = vmatpush1.bf16.msra.mxu0 0
        %735 = vmatprep.subr.bf16.mxu0 0
        %736 = vmatpush1.bf16.msra.mxu0 0
        %737 = vmatprep.subr.bf16.mxu0 0
        %738 = vmatpush1.bf16.msra.mxu0 0
        %739 = vmatprep.subr.bf16.mxu0 0
        %740 = vmatpush1.bf16.msra.mxu0 0
        %741 = vmatprep.subr.bf16.mxu0 %v533
        %742 = vmatpush1.bf16.msra.mxu0 %v530
        %743 = vmatprep.subr.bf16.mxu0 0
        %744 = vmatpush2.bf16.msra.mxu0 0
        %745 = vmatprep.subr.bf16.mxu0 0
        %746 = vmatpush2.bf16.msra.mxu0 0
        %747 = vmatprep.subr.bf16.mxu0 0
        %748 = vmatpush2.bf16.msra.mxu0 0
        %749 = vmatprep.subr.bf16.mxu0 0
        %750 = vmatpush2.bf16.msra.mxu0 0
        %751 = vmatprep.subr.bf16.mxu0 0
        %752 = vmatpush2.bf16.msra.mxu0 0
        %753 = vmatprep.subr.bf16.mxu0 0
        %754 = vmatpush2.bf16.msra.mxu0 0
        %755 = vmatprep.subr.bf16.mxu0 0
        %756 = vmatpush2.bf16.msra.mxu0 0
        %757 = vmatprep.subr.bf16.mxu0 0
        %758 = vmatpush2.bf16.msra.mxu0 0
        %759 = vmatprep.mubr.bf16.mxu0 0
        %760 = vmatmul.mubr.bf16.gmra.mxu0 %v505
        %v761 = vpop.f32.mrf.mxu0
        %v762 = vadd.f32 %v461, %v761
        %v763 = vpop.f32.mrf.mxu0
        %v764 = vadd.f32 %v461, %v763
        %v765 = vpop.f32.mrf.mxu0
        %v766 = vadd.f32 %v466, %v765
        %v767 = vpop.f32.mrf.mxu0
        %v768 = vadd.f32 %v466, %v767
        %769 = vmatprep.mubr.bf16.mxu0 0
        %770 = vmatmul.mubr.bf16.gmra.mxu0 %v508
        %v771 = vpop.f32.mrf.mxu0
        %v772 = vadd.f32 %v471, %v771
        %v773 = vpop.f32.mrf.mxu0
        %v774 = vadd.f32 %v471, %v773
        %v775 = vpop.f32.mrf.mxu0
        %v776 = vadd.f32 %v476, %v775
        %v777 = vpop.f32.mrf.mxu0
        %v778 = vadd.f32 %v476, %v777
        %779 = vmatprep.mubr.bf16.mxu0 0
        %780 = vmatmul.mubr.bf16.gmra.mxu0 %v511
        %v781 = vpop.f32.mrf.mxu0
        %v782 = vadd.f32 %v481, %v781
        %v783 = vpop.f32.mrf.mxu0
        %v784 = vadd.f32 %v481, %v783
        %v785 = vpop.f32.mrf.mxu0
        %v786 = vadd.f32 %v486, %v785
        %v787 = vpop.f32.mrf.mxu0
        %v788 = vadd.f32 %v486, %v787
        %789 = vdwg.mxu0
        %790 = vmatprep.subr.bf16.mxu0 0
        %791 = vmatpush1.bf16.msra.mxu0 0
        %792 = vmatprep.subr.bf16.mxu0 0
        %793 = vmatpush1.bf16.msra.mxu0 0
        %794 = vmatprep.subr.bf16.mxu0 0
        %795 = vmatpush1.bf16.msra.mxu0 0
        %796 = vmatprep.subr.bf16.mxu0 0
        %797 = vmatpush1.bf16.msra.mxu0 0
        %798 = vmatprep.subr.bf16.mxu0 0
        %799 = vmatpush1.bf16.msra.mxu0 0
        %800 = vmatprep.subr.bf16.mxu0 0
        %801 = vmatpush1.bf16.msra.mxu0 0
        %802 = vmatprep.subr.bf16.mxu0 0
        %803 = vmatpush1.bf16.msra.mxu0 0
        %804 = vmatprep.subr.bf16.mxu0 %v539
        %805 = vmatpush1.bf16.msra.mxu0 %v536
        %806 = vmatprep.subr.bf16.mxu0 0
        %807 = vmatpush2.bf16.msra.mxu0 0
        %808 = vmatprep.subr.bf16.mxu0 0
        %809 = vmatpush2.bf16.msra.mxu0 0
        %810 = vmatprep.subr.bf16.mxu0 0
        %811 = vmatpush2.bf16.msra.mxu0 0
        %812 = vmatprep.subr.bf16.mxu0 0
        %813 = vmatpush2.bf16.msra.mxu0 0
        %814 = vmatprep.subr.bf16.mxu0 0
        %815 = vmatpush2.bf16.msra.mxu0 0
        %816 = vmatprep.subr.bf16.mxu0 0
        %817 = vmatpush2.bf16.msra.mxu0 0
        %818 = vmatprep.subr.bf16.mxu0 0
        %819 = vmatpush2.bf16.msra.mxu0 0
        %820 = vmatprep.subr.bf16.mxu0 0
        %821 = vmatpush2.bf16.msra.mxu0 0
        %822 = vmatprep.mubr.bf16.mxu0 0
        %823 = vmatmul.mubr.bf16.gmra.mxu0 %v505
        %v824 = vpop.f32.mrf.mxu0
        %v825 = vadd.f32 %v461, %v824
        %v826 = vpop.f32.mrf.mxu0
        %v827 = vadd.f32 %v461, %v826
        %v828 = vpop.f32.mrf.mxu0
        %v829 = vadd.f32 %v466, %v828
        %v830 = vpop.f32.mrf.mxu0
        %v831 = vadd.f32 %v466, %v830
        %832 = vmatprep.mubr.bf16.mxu0 0
        %833 = vmatmul.mubr.bf16.gmra.mxu0 %v508
        %v834 = vpop.f32.mrf.mxu0
        %v835 = vadd.f32 %v471, %v834
        %v836 = vpop.f32.mrf.mxu0
        %v837 = vadd.f32 %v471, %v836
        %v838 = vpop.f32.mrf.mxu0
        %v839 = vadd.f32 %v476, %v838
        %v840 = vpop.f32.mrf.mxu0
        %v841 = vadd.f32 %v476, %v840
        %842 = vmatprep.mubr.bf16.mxu0 0
        %843 = vmatmul.mubr.bf16.gmra.mxu0 %v511
        %v844 = vpop.f32.mrf.mxu0
        %v845 = vadd.f32 %v481, %v844
        %v846 = vpop.f32.mrf.mxu0
        %v847 = vadd.f32 %v481, %v846
        %v848 = vpop.f32.mrf.mxu0
        %v849 = vadd.f32 %v486, %v848
        %v850 = vpop.f32.mrf.mxu0
        %v851 = vadd.f32 %v486, %v850
        %852 = vdwg.mxu0
        %853 = vmatprep.subr.bf16.mxu0 0
        %854 = vmatpush1.bf16.msra.mxu0 0
        %855 = vmatprep.subr.bf16.mxu0 0
        %856 = vmatpush1.bf16.msra.mxu0 0
        %857 = vmatprep.subr.bf16.mxu0 0
        %858 = vmatpush1.bf16.msra.mxu0 0
        %859 = vmatprep.subr.bf16.mxu0 0
        %860 = vmatpush1.bf16.msra.mxu0 0
        %861 = vmatprep.subr.bf16.mxu0 0
        %862 = vmatpush1.bf16.msra.mxu0 0
        %863 = vmatprep.subr.bf16.mxu0 0
        %864 = vmatpush1.bf16.msra.mxu0 0
        %865 = vmatprep.subr.bf16.mxu0 0
        %866 = vmatpush1.bf16.msra.mxu0 0
        %867 = vmatprep.subr.bf16.mxu0 %v545
        %868 = vmatpush1.bf16.msra.mxu0 %v542
        %869 = vmatprep.subr.bf16.mxu0 0
        %870 = vmatpush2.bf16.msra.mxu0 0
        %871 = vmatprep.subr.bf16.mxu0 0
        %872 = vmatpush2.bf16.msra.mxu0 0
        %873 = vmatprep.subr.bf16.mxu0 0
        %874 = vmatpush2.bf16.msra.mxu0 0
        %875 = vmatprep.subr.bf16.mxu0 0
        %876 = vmatpush2.bf16.msra.mxu0 0
        %877 = vmatprep.subr.bf16.mxu0 0
        %878 = vmatpush2.bf16.msra.mxu0 0
        %879 = vmatprep.subr.bf16.mxu0 0
        %880 = vmatpush2.bf16.msra.mxu0 0
        %881 = vmatprep.subr.bf16.mxu0 0
        %882 = vmatpush2.bf16.msra.mxu0 0
        %883 = vmatprep.subr.bf16.mxu0 0
        %884 = vmatpush2.bf16.msra.mxu0 0
        %885 = vmatprep.mubr.bf16.mxu0 0
        %886 = vmatmul.mubr.bf16.gmra.mxu0 %v505
        %v887 = vpop.f32.mrf.mxu0
        %v888 = vadd.f32 %v461, %v887
        %v889 = vpop.f32.mrf.mxu0
        %v890 = vadd.f32 %v461, %v889
        %v891 = vpop.f32.mrf.mxu0
        %v892 = vadd.f32 %v466, %v891
        %v893 = vpop.f32.mrf.mxu0
        %v894 = vadd.f32 %v466, %v893
        %895 = vmatprep.mubr.bf16.mxu0 0
        %896 = vmatmul.mubr.bf16.gmra.mxu0 %v508
        %v897 = vpop.f32.mrf.mxu0
        %v898 = vadd.f32 %v471, %v897
        %v899 = vpop.f32.mrf.mxu0
        %v900 = vadd.f32 %v471, %v899
        %v901 = vpop.f32.mrf.mxu0
        %v902 = vadd.f32 %v476, %v901
        %v903 = vpop.f32.mrf.mxu0
        %v904 = vadd.f32 %v476, %v903
        %905 = vmatprep.mubr.bf16.mxu0 0
        %906 = vmatmul.mubr.bf16.gmra.mxu0 %v511
        %v907 = vpop.f32.mrf.mxu0
        %v908 = vadd.f32 %v481, %v907
        %v909 = vpop.f32.mrf.mxu0
        %v910 = vadd.f32 %v481, %v909
        %v911 = vpop.f32.mrf.mxu0
        %v912 = vadd.f32 %v486, %v911
        %v913 = vpop.f32.mrf.mxu0
        %v914 = vadd.f32 %v486, %v913
        %915 = vdwg.mxu0
        %916 = vmatprep.subr.bf16.mxu0 0
        %917 = vmatpush1.bf16.msra.mxu0 0
        %918 = vmatprep.subr.bf16.mxu0 0
        %919 = vmatpush1.bf16.msra.mxu0 0
        %920 = vmatprep.subr.bf16.mxu0 0
        %921 = vmatpush1.bf16.msra.mxu0 0
        %922 = vmatprep.subr.bf16.mxu0 0
        %923 = vmatpush1.bf16.msra.mxu0 0
        %924 = vmatprep.subr.bf16.mxu0 0
        %925 = vmatpush1.bf16.msra.mxu0 0
        %926 = vmatprep.subr.bf16.mxu0 0
        %927 = vmatpush1.bf16.msra.mxu0 0
        %928 = vmatprep.subr.bf16.mxu0 0
        %929 = vmatpush1.bf16.msra.mxu0 0
        %930 = vmatprep.subr.bf16.mxu0 %v551
        %931 = vmatpush1.bf16.msra.mxu0 %v548
        %932 = vmatprep.subr.bf16.mxu0 0
        %933 = vmatpush2.bf16.msra.mxu0 0
        %934 = vmatprep.subr.bf16.mxu0 0
        %935 = vmatpush2.bf16.msra.mxu0 0
        %936 = vmatprep.subr.bf16.mxu0 0
        %937 = vmatpush2.bf16.msra.mxu0 0
        %938 = vmatprep.subr.bf16.mxu0 0
        %939 = vmatpush2.bf16.msra.mxu0 0
        %940 = vmatprep.subr.bf16.mxu0 0
        %941 = vmatpush2.bf16.msra.mxu0 0
        %942 = vmatprep.subr.bf16.mxu0 0
        %943 = vmatpush2.bf16.msra.mxu0 0
        %944 = vmatprep.subr.bf16.mxu0 0
        %945 = vmatpush2.bf16.msra.mxu0 0
        %946 = vmatprep.subr.bf16.mxu0 0
        %947 = vmatpush2.bf16.msra.mxu0 0
        %948 = vmatprep.mubr.bf16.mxu0 0
        %949 = vmatmul.mubr.bf16.gmra.mxu0 %v505
        %v950 = vpop.f32.mrf.mxu0
        %v951 = vadd.f32 %v461, %v950
        %v952 = vpop.f32.mrf.mxu0
        %v953 = vadd.f32 %v461, %v952
        %v954 = vpop.f32.mrf.mxu0
        %v955 = vadd.f32 %v466, %v954
        %v956 = vpop.f32.mrf.mxu0
        %v957 = vadd.f32 %v466, %v956
        %958 = vmatprep.mubr.bf16.mxu0 0
        %959 = vmatmul.mubr.bf16.gmra.mxu0 %v508
        %v960 = vpop.f32.mrf.mxu0
        %v961 = vadd.f32 %v471, %v960
        %v962 = vpop.f32.mrf.mxu0
        %v963 = vadd.f32 %v471, %v962
        %v964 = vpop.f32.mrf.mxu0
        %v965 = vadd.f32 %v476, %v964
        %v966 = vpop.f32.mrf.mxu0
        %v967 = vadd.f32 %v476, %v966
        %968 = vmatprep.mubr.bf16.mxu0 0
        %969 = vmatmul.mubr.bf16.gmra.mxu0 %v511
        %v970 = vpop.f32.mrf.mxu0
        %v971 = vadd.f32 %v481, %v970
        %v972 = vpop.f32.mrf.mxu0
        %v973 = vadd.f32 %v481, %v972
        %v974 = vpop.f32.mrf.mxu0
        %v975 = vadd.f32 %v486, %v974
        %v976 = vpop.f32.mrf.mxu0
        %v977 = vadd.f32 %v486, %v976
        %978 = vdwg.mxu0
        %979 = vmatprep.subr.bf16.mxu0 0
        %980 = vmatpush1.bf16.msra.mxu0 0
        %981 = vmatprep.subr.bf16.mxu0 0
        %982 = vmatpush1.bf16.msra.mxu0 0
        %983 = vmatprep.subr.bf16.mxu0 0
        %984 = vmatpush1.bf16.msra.mxu0 0
        %985 = vmatprep.subr.bf16.mxu0 0
        %986 = vmatpush1.bf16.msra.mxu0 0
        %987 = vmatprep.subr.bf16.mxu0 0
        %988 = vmatpush1.bf16.msra.mxu0 0
        %989 = vmatprep.subr.bf16.mxu0 0
        %990 = vmatpush1.bf16.msra.mxu0 0
        %991 = vmatprep.subr.bf16.mxu0 0
        %992 = vmatpush1.bf16.msra.mxu0 0
        %993 = vmatprep.subr.bf16.mxu0 %v557
        %994 = vmatpush1.bf16.msra.mxu0 %v554
        %995 = vmatprep.subr.bf16.mxu0 0
        %996 = vmatpush2.bf16.msra.mxu0 0
        %997 = vmatprep.subr.bf16.mxu0 0
        %998 = vmatpush2.bf16.msra.mxu0 0
        %999 = vmatprep.subr.bf16.mxu0 0
        %1000 = vmatpush2.bf16.msra.mxu0 0
        %1001 = vmatprep.subr.bf16.mxu0 0
        %1002 = vmatpush2.bf16.msra.mxu0 0
        %1003 = vmatprep.subr.bf16.mxu0 0
        %1004 = vmatpush2.bf16.msra.mxu0 0
        %1005 = vmatprep.subr.bf16.mxu0 0
        %1006 = vmatpush2.bf16.msra.mxu0 0
        %1007 = vmatprep.subr.bf16.mxu0 0
        %1008 = vmatpush2.bf16.msra.mxu0 0
        %1009 = vmatprep.subr.bf16.mxu0 0
        %1010 = vmatpush2.bf16.msra.mxu0 0
        %1011 = vmatprep.mubr.bf16.mxu0 0
        %1012 = vmatmul.mubr.bf16.gmra.mxu0 %v505
        %v1013 = vpop.f32.mrf.mxu0
        %v1014 = vadd.f32 %v461, %v1013
        %v1015 = vpop.f32.mrf.mxu0
        %v1016 = vadd.f32 %v461, %v1015
        %v1017 = vpop.f32.mrf.mxu0
        %v1018 = vadd.f32 %v466, %v1017
        %v1019 = vpop.f32.mrf.mxu0
        %v1020 = vadd.f32 %v466, %v1019
        %1021 = vmatprep.mubr.bf16.mxu0 0
        %1022 = vmatmul.mubr.bf16.gmra.mxu0 %v508
        %v1023 = vpop.f32.mrf.mxu0
        %v1024 = vadd.f32 %v471, %v1023
        %v1025 = vpop.f32.mrf.mxu0
        %v1026 = vadd.f32 %v471, %v1025
        %v1027 = vpop.f32.mrf.mxu0
        %v1028 = vadd.f32 %v476, %v1027
        %v1029 = vpop.f32.mrf.mxu0
        %v1030 = vadd.f32 %v476, %v1029
        %1031 = vmatprep.mubr.bf16.mxu0 0
        %1032 = vmatmul.mubr.bf16.gmra.mxu0 %v511
        %v1033 = vpop.f32.mrf.mxu0
        %v1034 = vadd.f32 %v481, %v1033
        %v1035 = vpop.f32.mrf.mxu0
        %v1036 = vadd.f32 %v481, %v1035
        %v1037 = vpop.f32.mrf.mxu0
        %v1038 = vadd.f32 %v486, %v1037
        %v1039 = vpop.f32.mrf.mxu0
        %v1040 = vadd.f32 %v486, %v1039
        %1041 = vdwg.mxu0
        %1042 = vmatprep.subr.bf16.mxu0 0
        %1043 = vmatpush1.bf16.msra.mxu0 0
        %1044 = vmatprep.subr.bf16.mxu0 0
        %1045 = vmatpush1.bf16.msra.mxu0 0
        %1046 = vmatprep.subr.bf16.mxu0 0
        %1047 = vmatpush1.bf16.msra.mxu0 0
        %1048 = vmatprep.subr.bf16.mxu0 0
        %1049 = vmatpush1.bf16.msra.mxu0 0
        %1050 = vmatprep.subr.bf16.mxu0 0
        %1051 = vmatpush1.bf16.msra.mxu0 0
        %1052 = vmatprep.subr.bf16.mxu0 0
        %1053 = vmatpush1.bf16.msra.mxu0 0
        %1054 = vmatprep.subr.bf16.mxu0 0
        %1055 = vmatpush1.bf16.msra.mxu0 0
        %1056 = vmatprep.subr.bf16.mxu0 %v563
        %1057 = vmatpush1.bf16.msra.mxu0 %v560
        %1058 = vmatprep.subr.bf16.mxu0 0
        %1059 = vmatpush2.bf16.msra.mxu0 0
        %1060 = vmatprep.subr.bf16.mxu0 0
        %1061 = vmatpush2.bf16.msra.mxu0 0
        %1062 = vmatprep.subr.bf16.mxu0 0
        %1063 = vmatpush2.bf16.msra.mxu0 0
        %1064 = vmatprep.subr.bf16.mxu0 0
        %1065 = vmatpush2.bf16.msra.mxu0 0
        %1066 = vmatprep.subr.bf16.mxu0 0
        %1067 = vmatpush2.bf16.msra.mxu0 0
        %1068 = vmatprep.subr.bf16.mxu0 0
        %1069 = vmatpush2.bf16.msra.mxu0 0
        %1070 = vmatprep.subr.bf16.mxu0 0
        %1071 = vmatpush2.bf16.msra.mxu0 0
        %1072 = vmatprep.subr.bf16.mxu0 0
        %1073 = vmatpush2.bf16.msra.mxu0 0
        %1074 = vmatprep.mubr.bf16.mxu0 0
        %1075 = vmatmul.mubr.bf16.gmra.mxu0 %v505
        %v1076 = vpop.f32.mrf.mxu0
        %v1077 = vadd.f32 %v461, %v1076
        %v1078 = vpop.f32.mrf.mxu0
        %v1079 = vadd.f32 %v461, %v1078
        %v1080 = vpop.f32.mrf.mxu0
        %v1081 = vadd.f32 %v466, %v1080
        %v1082 = vpop.f32.mrf.mxu0
        %v1083 = vadd.f32 %v466, %v1082
        %1084 = vmatprep.mubr.bf16.mxu0 0
        %1085 = vmatmul.mubr.bf16.gmra.mxu0 %v508
        %v1086 = vpop.f32.mrf.mxu0
        %v1087 = vadd.f32 %v471, %v1086
        %v1088 = vpop.f32.mrf.mxu0
        %v1089 = vadd.f32 %v471, %v1088
        %v1090 = vpop.f32.mrf.mxu0
        %v1091 = vadd.f32 %v476, %v1090
        %v1092 = vpop.f32.mrf.mxu0
        %v1093 = vadd.f32 %v476, %v1092
        %1094 = vmatprep.mubr.bf16.mxu0 0
        %1095 = vmatmul.mubr.bf16.gmra.mxu0 %v511
        %v1096 = vpop.f32.mrf.mxu0
        %v1097 = vadd.f32 %v481, %v1096
        %v1098 = vpop.f32.mrf.mxu0
        %v1099 = vadd.f32 %v481, %v1098
        %v1100 = vpop.f32.mrf.mxu0
        %v1101 = vadd.f32 %v486, %v1100
        %v1102 = vpop.f32.mrf.mxu0
        %v1103 = vadd.f32 %v486, %v1102
        %1104 = vdwg.mxu0
        %1105 = vmatprep.subr.bf16.mxu0 0
        %1106 = vmatpush1.bf16.msra.mxu0 0
        %1107 = vmatprep.subr.bf16.mxu0 0
        %1108 = vmatpush1.bf16.msra.mxu0 0
        %1109 = vmatprep.subr.bf16.mxu0 0
        %1110 = vmatpush1.bf16.msra.mxu0 0
        %1111 = vmatprep.subr.bf16.mxu0 0
        %1112 = vmatpush1.bf16.msra.mxu0 0
        %1113 = vmatprep.subr.bf16.mxu0 0
        %1114 = vmatpush1.bf16.msra.mxu0 0
        %1115 = vmatprep.subr.bf16.mxu0 0
        %1116 = vmatpush1.bf16.msra.mxu0 0
        %1117 = vmatprep.subr.bf16.mxu0 0
        %1118 = vmatpush1.bf16.msra.mxu0 0
        %1119 = vmatprep.subr.bf16.mxu0 %v569
        %1120 = vmatpush1.bf16.msra.mxu0 %v566
        %1121 = vmatprep.subr.bf16.mxu0 0
        %1122 = vmatpush2.bf16.msra.mxu0 0
        %1123 = vmatprep.subr.bf16.mxu0 0
        %1124 = vmatpush2.bf16.msra.mxu0 0
        %1125 = vmatprep.subr.bf16.mxu0 0
        %1126 = vmatpush2.bf16.msra.mxu0 0
        %1127 = vmatprep.subr.bf16.mxu0 0
        %1128 = vmatpush2.bf16.msra.mxu0 0
        %1129 = vmatprep.subr.bf16.mxu0 0
        %1130 = vmatpush2.bf16.msra.mxu0 0
        %1131 = vmatprep.subr.bf16.mxu0 0
        %1132 = vmatpush2.bf16.msra.mxu0 0
        %1133 = vmatprep.subr.bf16.mxu0 0
        %1134 = vmatpush2.bf16.msra.mxu0 0
        %1135 = vmatprep.subr.bf16.mxu0 0
        %1136 = vmatpush2.bf16.msra.mxu0 0
        %1137 = vmatprep.mubr.bf16.mxu0 0
        %1138 = vmatmul.mubr.bf16.gmra.mxu0 %v505
        %v1139 = vpop.f32.mrf.mxu0
        %v1140 = vadd.f32 %v461, %v1139
        %v1141 = vpop.f32.mrf.mxu0
        %v1142 = vadd.f32 %v461, %v1141
        %v1143 = vpop.f32.mrf.mxu0
        %v1144 = vadd.f32 %v466, %v1143
        %v1145 = vpop.f32.mrf.mxu0
        %v1146 = vadd.f32 %v466, %v1145
        %1147 = vmatprep.mubr.bf16.mxu0 0
        %1148 = vmatmul.mubr.bf16.gmra.mxu0 %v508
        %v1149 = vpop.f32.mrf.mxu0
        %v1150 = vadd.f32 %v471, %v1149
        %v1151 = vpop.f32.mrf.mxu0
        %v1152 = vadd.f32 %v471, %v1151
        %v1153 = vpop.f32.mrf.mxu0
        %v1154 = vadd.f32 %v476, %v1153
        %v1155 = vpop.f32.mrf.mxu0
        %v1156 = vadd.f32 %v476, %v1155
        %1157 = vmatprep.mubr.bf16.mxu0 0
        %1158 = vmatmul.mubr.bf16.gmra.mxu0 %v511
        %v1159 = vpop.f32.mrf.mxu0
        %v1160 = vadd.f32 %v481, %v1159
        %v1161 = vpop.f32.mrf.mxu0
        %v1162 = vadd.f32 %v481, %v1161
        %v1163 = vpop.f32.mrf.mxu0
        %v1164 = vadd.f32 %v486, %v1163
        %v1165 = vpop.f32.mrf.mxu0
        %v1166 = vadd.f32 %v486, %v1165
        %1167 = vdwg.mxu0
        %1168 = vmatprep.subr.bf16.mxu0 0
        %1169 = vmatpush1.bf16.msra.mxu0 0
        %1170 = vmatprep.subr.bf16.mxu0 0
        %1171 = vmatpush1.bf16.msra.mxu0 0
        %1172 = vmatprep.subr.bf16.mxu0 0
        %1173 = vmatpush1.bf16.msra.mxu0 0
        %1174 = vmatprep.subr.bf16.mxu0 0
        %1175 = vmatpush1.bf16.msra.mxu0 0
        %1176 = vmatprep.subr.bf16.mxu0 0
        %1177 = vmatpush1.bf16.msra.mxu0 0
        %1178 = vmatprep.subr.bf16.mxu0 0
        %1179 = vmatpush1.bf16.msra.mxu0 0
        %1180 = vmatprep.subr.bf16.mxu0 0
        %1181 = vmatpush1.bf16.msra.mxu0 0
        %1182 = vmatprep.subr.bf16.mxu0 %v575
        %1183 = vmatpush1.bf16.msra.mxu0 %v572
        %1184 = vmatprep.subr.bf16.mxu0 0
        %1185 = vmatpush2.bf16.msra.mxu0 0
        %1186 = vmatprep.subr.bf16.mxu0 0
        %1187 = vmatpush2.bf16.msra.mxu0 0
        %1188 = vmatprep.subr.bf16.mxu0 0
        %1189 = vmatpush2.bf16.msra.mxu0 0
        %1190 = vmatprep.subr.bf16.mxu0 0
        %1191 = vmatpush2.bf16.msra.mxu0 0
        %1192 = vmatprep.subr.bf16.mxu0 0
        %1193 = vmatpush2.bf16.msra.mxu0 0
        %1194 = vmatprep.subr.bf16.mxu0 0
        %1195 = vmatpush2.bf16.msra.mxu0 0
        %1196 = vmatprep.subr.bf16.mxu0 0
        %1197 = vmatpush2.bf16.msra.mxu0 0
        %1198 = vmatprep.subr.bf16.mxu0 0
        %1199 = vmatpush2.bf16.msra.mxu0 0
        %1200 = vmatprep.mubr.bf16.mxu0 0
        %1201 = vmatmul.mubr.bf16.gmra.mxu0 %v505
        %v1202 = vpop.f32.mrf.mxu0
        %v1203 = vadd.f32 %v461, %v1202
        %v1204 = vpop.f32.mrf.mxu0
        %v1205 = vadd.f32 %v461, %v1204
        %v1206 = vpop.f32.mrf.mxu0
        %v1207 = vadd.f32 %v466, %v1206
        %v1208 = vpop.f32.mrf.mxu0
        %v1209 = vadd.f32 %v466, %v1208
        %1210 = vmatprep.mubr.bf16.mxu0 0
        %1211 = vmatmul.mubr.bf16.gmra.mxu0 %v508
        %v1212 = vpop.f32.mrf.mxu0
        %v1213 = vadd.f32 %v471, %v1212
        %v1214 = vpop.f32.mrf.mxu0
        %v1215 = vadd.f32 %v471, %v1214
        %v1216 = vpop.f32.mrf.mxu0
        %v1217 = vadd.f32 %v476, %v1216
        %v1218 = vpop.f32.mrf.mxu0
        %v1219 = vadd.f32 %v476, %v1218
        %1220 = vmatprep.mubr.bf16.mxu0 0
        %1221 = vmatmul.mubr.bf16.gmra.mxu0 %v511
        %v1222 = vpop.f32.mrf.mxu0
        %v1223 = vadd.f32 %v481, %v1222
        %v1224 = vpop.f32.mrf.mxu0
        %v1225 = vadd.f32 %v481, %v1224
        %v1226 = vpop.f32.mrf.mxu0
        %v1227 = vadd.f32 %v486, %v1226
        %v1228 = vpop.f32.mrf.mxu0
        %v1229 = vadd.f32 %v486, %v1228
        %1230 = vdwg.mxu0
        %1231 = vmatprep.subr.bf16.mxu0 0
        %1232 = vmatpush1.bf16.msra.mxu0 0
        %1233 = vmatprep.subr.bf16.mxu0 0
        %1234 = vmatpush1.bf16.msra.mxu0 0
        %1235 = vmatprep.subr.bf16.mxu0 0
        %1236 = vmatpush1.bf16.msra.mxu0 0
        %1237 = vmatprep.subr.bf16.mxu0 0
        %1238 = vmatpush1.bf16.msra.mxu0 0
        %1239 = vmatprep.subr.bf16.mxu0 0
        %1240 = vmatpush1.bf16.msra.mxu0 0
        %1241 = vmatprep.subr.bf16.mxu0 0
        %1242 = vmatpush1.bf16.msra.mxu0 0
        %1243 = vmatprep.subr.bf16.mxu0 0
        %1244 = vmatpush1.bf16.msra.mxu0 0
        %1245 = vmatprep.subr.bf16.mxu0 %v581
        %1246 = vmatpush1.bf16.msra.mxu0 %v578
        %1247 = vmatprep.subr.bf16.mxu0 0
        %1248 = vmatpush2.bf16.msra.mxu0 0
        %1249 = vmatprep.subr.bf16.mxu0 0
        %1250 = vmatpush2.bf16.msra.mxu0 0
        %1251 = vmatprep.subr.bf16.mxu0 0
        %1252 = vmatpush2.bf16.msra.mxu0 0
        %1253 = vmatprep.subr.bf16.mxu0 0
        %1254 = vmatpush2.bf16.msra.mxu0 0
        %1255 = vmatprep.subr.bf16.mxu0 0
        %1256 = vmatpush2.bf16.msra.mxu0 0
        %1257 = vmatprep.subr.bf16.mxu0 0
        %1258 = vmatpush2.bf16.msra.mxu0 0
        %1259 = vmatprep.subr.bf16.mxu0 0
        %1260 = vmatpush2.bf16.msra.mxu0 0
        %1261 = vmatprep.subr.bf16.mxu0 0
        %1262 = vmatpush2.bf16.msra.mxu0 0
        %1263 = vmatprep.mubr.bf16.mxu0 0
        %1264 = vmatmul.mubr.bf16.gmra.mxu0 %v505
        %v1265 = vpop.f32.mrf.mxu0
        %v1266 = vadd.f32 %v461, %v1265
        %v1267 = vpop.f32.mrf.mxu0
        %v1268 = vadd.f32 %v461, %v1267
        %v1269 = vpop.f32.mrf.mxu0
        %v1270 = vadd.f32 %v466, %v1269
        %v1271 = vpop.f32.mrf.mxu0
        %v1272 = vadd.f32 %v466, %v1271
        %1273 = vmatprep.mubr.bf16.mxu0 0
        %1274 = vmatmul.mubr.bf16.gmra.mxu0 %v508
        %v1275 = vpop.f32.mrf.mxu0
        %v1276 = vadd.f32 %v471, %v1275
        %v1277 = vpop.f32.mrf.mxu0
        %v1278 = vadd.f32 %v471, %v1277
        %v1279 = vpop.f32.mrf.mxu0
        %v1280 = vadd.f32 %v476, %v1279
        %v1281 = vpop.f32.mrf.mxu0
        %v1282 = vadd.f32 %v476, %v1281
        %1283 = vmatprep.mubr.bf16.mxu0 0
        %1284 = vmatmul.mubr.bf16.gmra.mxu0 %v511
        %v1285 = vpop.f32.mrf.mxu0
        %v1286 = vadd.f32 %v481, %v1285
        %v1287 = vpop.f32.mrf.mxu0
        %v1288 = vadd.f32 %v481, %v1287
        %v1289 = vpop.f32.mrf.mxu0
        %v1290 = vadd.f32 %v486, %v1289
        %v1291 = vpop.f32.mrf.mxu0
        %v1292 = vadd.f32 %v486, %v1291
        %1293 = vdwg.mxu0
        %1294 = vmatprep.subr.bf16.mxu0 0
        %1295 = vmatpush1.bf16.msra.mxu0 0
        %1296 = vmatprep.subr.bf16.mxu0 0
        %1297 = vmatpush1.bf16.msra.mxu0 0
        %1298 = vmatprep.subr.bf16.mxu0 0
        %1299 = vmatpush1.bf16.msra.mxu0 0
        %1300 = vmatprep.subr.bf16.mxu0 0
        %1301 = vmatpush1.bf16.msra.mxu0 0
        %1302 = vmatprep.subr.bf16.mxu0 0
        %1303 = vmatpush1.bf16.msra.mxu0 0
        %1304 = vmatprep.subr.bf16.mxu0 0
        %1305 = vmatpush1.bf16.msra.mxu0 0
        %1306 = vmatprep.subr.bf16.mxu0 0
        %1307 = vmatpush1.bf16.msra.mxu0 0
        %1308 = vmatprep.subr.bf16.mxu0 %v587
        %1309 = vmatpush1.bf16.msra.mxu0 %v584
        %1310 = vmatprep.subr.bf16.mxu0 0
        %1311 = vmatpush2.bf16.msra.mxu0 0
        %1312 = vmatprep.subr.bf16.mxu0 0
        %1313 = vmatpush2.bf16.msra.mxu0 0
        %1314 = vmatprep.subr.bf16.mxu0 0
        %1315 = vmatpush2.bf16.msra.mxu0 0
        %1316 = vmatprep.subr.bf16.mxu0 0
        %1317 = vmatpush2.bf16.msra.mxu0 0
        %1318 = vmatprep.subr.bf16.mxu0 0
        %1319 = vmatpush2.bf16.msra.mxu0 0
        %1320 = vmatprep.subr.bf16.mxu0 0
        %1321 = vmatpush2.bf16.msra.mxu0 0
        %1322 = vmatprep.subr.bf16.mxu0 0
        %1323 = vmatpush2.bf16.msra.mxu0 0
        %1324 = vmatprep.subr.bf16.mxu0 0
        %1325 = vmatpush2.bf16.msra.mxu0 0
        %1326 = vmatprep.mubr.bf16.mxu0 0
        %1327 = vmatmul.mubr.bf16.gmra.mxu0 %v505
        %v1328 = vpop.f32.mrf.mxu0
        %v1329 = vadd.f32 %v461, %v1328
        %v1330 = vpop.f32.mrf.mxu0
        %v1331 = vadd.f32 %v461, %v1330
        %v1332 = vpop.f32.mrf.mxu0
        %v1333 = vadd.f32 %v466, %v1332
        %v1334 = vpop.f32.mrf.mxu0
        %v1335 = vadd.f32 %v466, %v1334
        %1336 = vmatprep.mubr.bf16.mxu0 0
        %1337 = vmatmul.mubr.bf16.gmra.mxu0 %v508
        %v1338 = vpop.f32.mrf.mxu0
        %v1339 = vadd.f32 %v471, %v1338
        %v1340 = vpop.f32.mrf.mxu0
        %v1341 = vadd.f32 %v471, %v1340
        %v1342 = vpop.f32.mrf.mxu0
        %v1343 = vadd.f32 %v476, %v1342
        %v1344 = vpop.f32.mrf.mxu0
        %v1345 = vadd.f32 %v476, %v1344
        %1346 = vmatprep.mubr.bf16.mxu0 0
        %1347 = vmatmul.mubr.bf16.gmra.mxu0 %v511
        %v1348 = vpop.f32.mrf.mxu0
        %v1349 = vadd.f32 %v481, %v1348
        %v1350 = vpop.f32.mrf.mxu0
        %v1351 = vadd.f32 %v481, %v1350
        %v1352 = vpop.f32.mrf.mxu0
        %v1353 = vadd.f32 %v486, %v1352
        %v1354 = vpop.f32.mrf.mxu0
        %v1355 = vadd.f32 %v486, %v1354
        %1356 = vdwg.mxu0
        %1357 = vmatprep.subr.bf16.mxu0 0
        %1358 = vmatpush1.bf16.msra.mxu0 0
        %1359 = vmatprep.subr.bf16.mxu0 0
        %1360 = vmatpush1.bf16.msra.mxu0 0
        %1361 = vmatprep.subr.bf16.mxu0 0
        %1362 = vmatpush1.bf16.msra.mxu0 0
        %1363 = vmatprep.subr.bf16.mxu0 0
        %1364 = vmatpush1.bf16.msra.mxu0 0
        %1365 = vmatprep.subr.bf16.mxu0 0
        %1366 = vmatpush1.bf16.msra.mxu0 0
        %1367 = vmatprep.subr.bf16.mxu0 0
        %1368 = vmatpush1.bf16.msra.mxu0 0
        %1369 = vmatprep.subr.bf16.mxu0 0
        %1370 = vmatpush1.bf16.msra.mxu0 0
        %1371 = vmatprep.subr.bf16.mxu0 %v593
        %1372 = vmatpush1.bf16.msra.mxu0 %v590
        %1373 = vmatprep.subr.bf16.mxu0 0
        %1374 = vmatpush2.bf16.msra.mxu0 0
        %1375 = vmatprep.subr.bf16.mxu0 0
        %1376 = vmatpush2.bf16.msra.mxu0 0
        %1377 = vmatprep.subr.bf16.mxu0 0
        %1378 = vmatpush2.bf16.msra.mxu0 0
        %1379 = vmatprep.subr.bf16.mxu0 0
        %1380 = vmatpush2.bf16.msra.mxu0 0
        %1381 = vmatprep.subr.bf16.mxu0 0
        %1382 = vmatpush2.bf16.msra.mxu0 0
        %1383 = vmatprep.subr.bf16.mxu0 0
        %1384 = vmatpush2.bf16.msra.mxu0 0
        %1385 = vmatprep.subr.bf16.mxu0 0
        %1386 = vmatpush2.bf16.msra.mxu0 0
        %1387 = vmatprep.subr.bf16.mxu0 0
        %1388 = vmatpush2.bf16.msra.mxu0 0
        %1389 = vmatprep.mubr.bf16.mxu0 0
        %1390 = vmatmul.mubr.bf16.gmra.mxu0 %v505
        %v1391 = vpop.f32.mrf.mxu0
        %v1392 = vadd.f32 %v461, %v1391
        %v1393 = vpop.f32.mrf.mxu0
        %v1394 = vadd.f32 %v461, %v1393
        %v1395 = vpop.f32.mrf.mxu0
        %v1396 = vadd.f32 %v466, %v1395
        %v1397 = vpop.f32.mrf.mxu0
        %v1398 = vadd.f32 %v466, %v1397
        %1399 = vmatprep.mubr.bf16.mxu0 0
        %1400 = vmatmul.mubr.bf16.gmra.mxu0 %v508
        %v1401 = vpop.f32.mrf.mxu0
        %v1402 = vadd.f32 %v471, %v1401
        %v1403 = vpop.f32.mrf.mxu0
        %v1404 = vadd.f32 %v471, %v1403
        %v1405 = vpop.f32.mrf.mxu0
        %v1406 = vadd.f32 %v476, %v1405
        %v1407 = vpop.f32.mrf.mxu0
        %v1408 = vadd.f32 %v476, %v1407
        %1409 = vmatprep.mubr.bf16.mxu0 0
        %1410 = vmatmul.mubr.bf16.gmra.mxu0 %v511
        %v1411 = vpop.f32.mrf.mxu0
        %v1412 = vadd.f32 %v481, %v1411
        %v1413 = vpop.f32.mrf.mxu0
        %v1414 = vadd.f32 %v481, %v1413
        %v1415 = vpop.f32.mrf.mxu0
        %v1416 = vadd.f32 %v486, %v1415
        %v1417 = vpop.f32.mrf.mxu0
        %v1418 = vadd.f32 %v486, %v1417
        %1419 = vdwg.mxu0
        %1420 = vmatprep.subr.bf16.mxu0 0
        %1421 = vmatpush1.bf16.msra.mxu0 0
        %1422 = vmatprep.subr.bf16.mxu0 0
        %1423 = vmatpush1.bf16.msra.mxu0 0
        %1424 = vmatprep.subr.bf16.mxu0 0
        %1425 = vmatpush1.bf16.msra.mxu0 0
        %1426 = vmatprep.subr.bf16.mxu0 0
        %1427 = vmatpush1.bf16.msra.mxu0 0
        %1428 = vmatprep.subr.bf16.mxu0 0
        %1429 = vmatpush1.bf16.msra.mxu0 0
        %1430 = vmatprep.subr.bf16.mxu0 0
        %1431 = vmatpush1.bf16.msra.mxu0 0
        %1432 = vmatprep.subr.bf16.mxu0 0
        %1433 = vmatpush1.bf16.msra.mxu0 0
        %1434 = vmatprep.subr.bf16.mxu0 %v599
        %1435 = vmatpush1.bf16.msra.mxu0 %v596
        %1436 = vmatprep.subr.bf16.mxu0 0
        %1437 = vmatpush2.bf16.msra.mxu0 0
        %1438 = vmatprep.subr.bf16.mxu0 0
        %1439 = vmatpush2.bf16.msra.mxu0 0
        %1440 = vmatprep.subr.bf16.mxu0 0
        %1441 = vmatpush2.bf16.msra.mxu0 0
        %1442 = vmatprep.subr.bf16.mxu0 0
        %1443 = vmatpush2.bf16.msra.mxu0 0
        %1444 = vmatprep.subr.bf16.mxu0 0
        %1445 = vmatpush2.bf16.msra.mxu0 0
        %1446 = vmatprep.subr.bf16.mxu0 0
        %1447 = vmatpush2.bf16.msra.mxu0 0
        %1448 = vmatprep.subr.bf16.mxu0 0
        %1449 = vmatpush2.bf16.msra.mxu0 0
        %1450 = vmatprep.subr.bf16.mxu0 0
        %1451 = vmatpush2.bf16.msra.mxu0 0
        %1452 = vmatprep.mubr.bf16.mxu0 0
        %1453 = vmatmul.mubr.bf16.gmra.mxu0 %v505
        %v1454 = vpop.f32.mrf.mxu0
        %v1455 = vadd.f32 %v461, %v1454
        %v1456 = vpop.f32.mrf.mxu0
        %v1457 = vadd.f32 %v461, %v1456
        %v1458 = vpop.f32.mrf.mxu0
        %v1459 = vadd.f32 %v466, %v1458
        %v1460 = vpop.f32.mrf.mxu0
        %v1461 = vadd.f32 %v466, %v1460
        %1462 = vmatprep.mubr.bf16.mxu0 0
        %1463 = vmatmul.mubr.bf16.gmra.mxu0 %v508
        %v1464 = vpop.f32.mrf.mxu0
        %v1465 = vadd.f32 %v471, %v1464
        %v1466 = vpop.f32.mrf.mxu0
        %v1467 = vadd.f32 %v471, %v1466
        %v1468 = vpop.f32.mrf.mxu0
        %v1469 = vadd.f32 %v476, %v1468
        %v1470 = vpop.f32.mrf.mxu0
        %v1471 = vadd.f32 %v476, %v1470
        %1472 = vmatprep.mubr.bf16.mxu0 0
        %1473 = vmatmul.mubr.bf16.gmra.mxu0 %v511
        %v1474 = vpop.f32.mrf.mxu0
        %v1475 = vadd.f32 %v481, %v1474
        %v1476 = vpop.f32.mrf.mxu0
        %v1477 = vadd.f32 %v481, %v1476
        %v1478 = vpop.f32.mrf.mxu0
        %v1479 = vadd.f32 %v486, %v1478
        %v1480 = vpop.f32.mrf.mxu0
        %v1481 = vadd.f32 %v486, %v1480
        %1482 = vdwg.mxu0
        %v1483 = vxor.u32 %v636, 2147483648
        %v1484 = vxor.u32 %v638, 2147483648
        %v1485 = vxor.u32 %v699, 2147483648
        %v1486 = vxor.u32 %v701, 2147483648
        %v1487 = vxor.u32 %v762, 2147483648
        %v1488 = vxor.u32 %v764, 2147483648
        %v1489 = vxor.u32 %v825, 2147483648
        %v1490 = vxor.u32 %v827, 2147483648
        %v1491 = vxor.u32 %v888, 2147483648
        %v1492 = vxor.u32 %v890, 2147483648
        %v1493 = vxor.u32 %v951, 2147483648
        %v1494 = vxor.u32 %v953, 2147483648
        %v1495 = vxor.u32 %v1014, 2147483648
        %v1496 = vxor.u32 %v1016, 2147483648
        %v1497 = vxor.u32 %v1077, 2147483648
        %v1498 = vxor.u32 %v1079, 2147483648
        %v1499 = vxor.u32 %v1140, 2147483648
        %v1500 = vxor.u32 %v1142, 2147483648
        %v1501 = vxor.u32 %v1203, 2147483648
        %v1502 = vxor.u32 %v1205, 2147483648
        %v1503 = vxor.u32 %v1266, 2147483648
        %v1504 = vxor.u32 %v1268, 2147483648
        %v1505 = vxor.u32 %v1329, 2147483648
        %v1506 = vxor.u32 %v1331, 2147483648
        %v1507 = vxor.u32 %v1392, 2147483648
        %v1508 = vxor.u32 %v1394, 2147483648
        %v1509 = vxor.u32 %v1455, 2147483648
        %v1510 = vxor.u32 %v1457, 2147483648
        %v1511 = vxor.u32 %v640, 2147483648
        %v1512 = vxor.u32 %v642, 2147483648
        %v1513 = vxor.u32 %v703, 2147483648
        %v1514 = vxor.u32 %v705, 2147483648
        %v1515 = vxor.u32 %v766, 2147483648
        %v1516 = vxor.u32 %v768, 2147483648
        %v1517 = vxor.u32 %v829, 2147483648
        %v1518 = vxor.u32 %v831, 2147483648
        %v1519 = vxor.u32 %v892, 2147483648
        %v1520 = vxor.u32 %v894, 2147483648
        %v1521 = vxor.u32 %v955, 2147483648
        %v1522 = vxor.u32 %v957, 2147483648
        %v1523 = vxor.u32 %v1018, 2147483648
        %v1524 = vxor.u32 %v1020, 2147483648
        %v1525 = vxor.u32 %v1081, 2147483648
        %v1526 = vxor.u32 %v1083, 2147483648
        %v1527 = vxor.u32 %v1144, 2147483648
        %v1528 = vxor.u32 %v1146, 2147483648
        %v1529 = vxor.u32 %v1207, 2147483648
        %v1530 = vxor.u32 %v1209, 2147483648
        %v1531 = vxor.u32 %v1270, 2147483648
        %v1532 = vxor.u32 %v1272, 2147483648
        %v1533 = vxor.u32 %v1333, 2147483648
        %v1534 = vxor.u32 %v1335, 2147483648
        %v1535 = vxor.u32 %v1396, 2147483648
        %v1536 = vxor.u32 %v1398, 2147483648
        %v1537 = vxor.u32 %v1459, 2147483648
        %v1538 = vxor.u32 %v1461, 2147483648
        %v1539 = vxor.u32 %v646, 2147483648
        %v1540 = vxor.u32 %v648, 2147483648
        %v1541 = vxor.u32 %v709, 2147483648
        %v1542 = vxor.u32 %v711, 2147483648
        %v1543 = vxor.u32 %v772, 2147483648
        %v1544 = vxor.u32 %v774, 2147483648
        %v1545 = vxor.u32 %v835, 2147483648
        %v1546 = vxor.u32 %v837, 2147483648
        %v1547 = vxor.u32 %v898, 2147483648
        %v1548 = vxor.u32 %v900, 2147483648
        %v1549 = vxor.u32 %v961, 2147483648
        %v1550 = vxor.u32 %v963, 2147483648
        %v1551 = vxor.u32 %v1024, 2147483648
        %v1552 = vxor.u32 %v1026, 2147483648
        %v1553 = vxor.u32 %v1087, 2147483648
        %v1554 = vxor.u32 %v1089, 2147483648
        %v1555 = vxor.u32 %v1150, 2147483648
        %v1556 = vxor.u32 %v1152, 2147483648
        %v1557 = vxor.u32 %v1213, 2147483648
        %v1558 = vxor.u32 %v1215, 2147483648
        %v1559 = vxor.u32 %v1276, 2147483648
        %v1560 = vxor.u32 %v1278, 2147483648
        %v1561 = vxor.u32 %v1339, 2147483648
        %v1562 = vxor.u32 %v1341, 2147483648
        %v1563 = vxor.u32 %v1402, 2147483648
        %v1564 = vxor.u32 %v1404, 2147483648
        %v1565 = vxor.u32 %v1465, 2147483648
        %v1566 = vxor.u32 %v1467, 2147483648
        %v1567 = vxor.u32 %v650, 2147483648
        %v1568 = vxor.u32 %v652, 2147483648
        %v1569 = vxor.u32 %v713, 2147483648
        %v1570 = vxor.u32 %v715, 2147483648
        %v1571 = vxor.u32 %v776, 2147483648
        %v1572 = vxor.u32 %v778, 2147483648
        %v1573 = vxor.u32 %v839, 2147483648
        %v1574 = vxor.u32 %v841, 2147483648
        %v1575 = vxor.u32 %v902, 2147483648
        %v1576 = vxor.u32 %v904, 2147483648
        %v1577 = vxor.u32 %v965, 2147483648
        %v1578 = vxor.u32 %v967, 2147483648
        %v1579 = vxor.u32 %v1028, 2147483648
        %v1580 = vxor.u32 %v1030, 2147483648
        %v1581 = vxor.u32 %v1091, 2147483648
        %v1582 = vxor.u32 %v1093, 2147483648
        %v1583 = vxor.u32 %v1154, 2147483648
        %v1584 = vxor.u32 %v1156, 2147483648
        %v1585 = vxor.u32 %v1217, 2147483648
        %v1586 = vxor.u32 %v1219, 2147483648
        %v1587 = vxor.u32 %v1280, 2147483648
        %v1588 = vxor.u32 %v1282, 2147483648
        %v1589 = vxor.u32 %v1343, 2147483648
        %v1590 = vxor.u32 %v1345, 2147483648
        %v1591 = vxor.u32 %v1406, 2147483648
        %v1592 = vxor.u32 %v1408, 2147483648
        %v1593 = vxor.u32 %v1469, 2147483648
        %v1594 = vxor.u32 %v1471, 2147483648
        %v1595 = vxor.u32 %v656, 2147483648
        %v1596 = vxor.u32 %v658, 2147483648
        %v1597 = vxor.u32 %v719, 2147483648
        %v1598 = vxor.u32 %v721, 2147483648
        %v1599 = vxor.u32 %v782, 2147483648
        %v1600 = vxor.u32 %v784, 2147483648
        %v1601 = vxor.u32 %v845, 2147483648
        %v1602 = vxor.u32 %v847, 2147483648
        %v1603 = vxor.u32 %v908, 2147483648
        %v1604 = vxor.u32 %v910, 2147483648
        %v1605 = vxor.u32 %v971, 2147483648
        %v1606 = vxor.u32 %v973, 2147483648
        %v1607 = vxor.u32 %v1034, 2147483648
        %v1608 = vxor.u32 %v1036, 2147483648
        %v1609 = vxor.u32 %v1097, 2147483648
        %v1610 = vxor.u32 %v1099, 2147483648
        %v1611 = vxor.u32 %v1160, 2147483648
        %v1612 = vxor.u32 %v1162, 2147483648
        %v1613 = vxor.u32 %v1223, 2147483648
        %v1614 = vxor.u32 %v1225, 2147483648
        %v1615 = vxor.u32 %v1286, 2147483648
        %v1616 = vxor.u32 %v1288, 2147483648
        %v1617 = vxor.u32 %v1349, 2147483648
        %v1618 = vxor.u32 %v1351, 2147483648
        %v1619 = vxor.u32 %v1412, 2147483648
        %v1620 = vxor.u32 %v1414, 2147483648
        %v1621 = vxor.u32 %v1475, 2147483648
        %v1622 = vxor.u32 %v1477, 2147483648
        %v1623 = vxor.u32 %v660, 2147483648
        %v1624 = vxor.u32 %v662, 2147483648
        %v1625 = vxor.u32 %v723, 2147483648
        %v1626 = vxor.u32 %v725, 2147483648
        %v1627 = vxor.u32 %v786, 2147483648
        %v1628 = vxor.u32 %v788, 2147483648
        %v1629 = vxor.u32 %v849, 2147483648
        %v1630 = vxor.u32 %v851, 2147483648
        %v1631 = vxor.u32 %v912, 2147483648
        %v1632 = vxor.u32 %v914, 2147483648
        %v1633 = vxor.u32 %v975, 2147483648
        %v1634 = vxor.u32 %v977, 2147483648
        %v1635 = vxor.u32 %v1038, 2147483648
        %v1636 = vxor.u32 %v1040, 2147483648
        %v1637 = vxor.u32 %v1101, 2147483648
        %v1638 = vxor.u32 %v1103, 2147483648
        %v1639 = vxor.u32 %v1164, 2147483648
        %v1640 = vxor.u32 %v1166, 2147483648
        %v1641 = vxor.u32 %v1227, 2147483648
        %v1642 = vxor.u32 %v1229, 2147483648
        %v1643 = vxor.u32 %v1290, 2147483648
        %v1644 = vxor.u32 %v1292, 2147483648
        %v1645 = vxor.u32 %v1353, 2147483648
        %v1646 = vxor.u32 %v1355, 2147483648
        %v1647 = vxor.u32 %v1416, 2147483648
        %v1648 = vxor.u32 %v1418, 2147483648
        %v1649 = vxor.u32 %v1479, 2147483648
        %v1650 = vxor.u32 %v1481, 2147483648
        %v1651 = vmul.f32 %v1483, 1.442695
        %v1652 = vpow.pop %v1651
        %v1653 = vmul.f32 %v1484, 1.442695
        %v1654 = vpow.pop %v1653
        %v1655 = vmul.f32 %v1485, 1.442695
        %v1656 = vpow.pop %v1655
        %v1657 = vmul.f32 %v1486, 1.442695
        %v1658 = vpow.pop %v1657
        %v1659 = vmul.f32 %v1487, 1.442695
        %v1660 = vpow.pop %v1659
        %v1661 = vmul.f32 %v1488, 1.442695
        %v1662 = vpow.pop %v1661
        %v1663 = vmul.f32 %v1489, 1.442695
        %v1664 = vpow.pop %v1663
        %v1665 = vmul.f32 %v1490, 1.442695
        %v1666 = vpow.pop %v1665
        %v1667 = vmul.f32 %v1491, 1.442695
        %v1668 = vpow.pop %v1667
        %v1669 = vmul.f32 %v1492, 1.442695
        %v1670 = vpow.pop %v1669
        %v1671 = vmul.f32 %v1493, 1.442695
        %v1672 = vpow.pop %v1671
        %v1673 = vmul.f32 %v1494, 1.442695
        %v1674 = vpow.pop %v1673
        %v1675 = vmul.f32 %v1495, 1.442695
        %v1676 = vpow.pop %v1675
        %v1677 = vmul.f32 %v1496, 1.442695
        %v1678 = vpow.pop %v1677
        %v1679 = vmul.f32 %v1497, 1.442695
        %v1680 = vpow.pop %v1679
        %v1681 = vmul.f32 %v1498, 1.442695
        %v1682 = vpow.pop %v1681
        %v1683 = vmul.f32 %v1499, 1.442695
        %v1684 = vpow.pop %v1683
        %v1685 = vmul.f32 %v1500, 1.442695
        %v1686 = vpow.pop %v1685
        %v1687 = vmul.f32 %v1501, 1.442695
        %v1688 = vpow.pop %v1687
        %v1689 = vmul.f32 %v1502, 1.442695
        %v1690 = vpow.pop %v1689
        %v1691 = vmul.f32 %v1503, 1.442695
        %v1692 = vpow.pop %v1691
        %v1693 = vmul.f32 %v1504, 1.442695
        %v1694 = vpow.pop %v1693
        %v1695 = vmul.f32 %v1505, 1.442695
        %v1696 = vpow.pop %v1695
        %v1697 = vmul.f32 %v1506, 1.442695
        %v1698 = vpow.pop %v1697
        %v1699 = vmul.f32 %v1507, 1.442695
        %v1700 = vpow.pop %v1699
        %v1701 = vmul.f32 %v1508, 1.442695
        %v1702 = vpow.pop %v1701
        %v1703 = vmul.f32 %v1509, 1.442695
        %v1704 = vpow.pop %v1703
        %v1705 = vmul.f32 %v1510, 1.442695
        %v1706 = vpow.pop %v1705
        %v1707 = vmul.f32 %v1511, 1.442695
        %v1708 = vpow.pop %v1707
        %v1709 = vmul.f32 %v1512, 1.442695
        %v1710 = vpow.pop %v1709
        %v1711 = vmul.f32 %v1513, 1.442695
        %v1712 = vpow.pop %v1711
        %v1713 = vmul.f32 %v1514, 1.442695
        %v1714 = vpow.pop %v1713
        %v1715 = vmul.f32 %v1515, 1.442695
        %v1716 = vpow.pop %v1715
        %v1717 = vmul.f32 %v1516, 1.442695
        %v1718 = vpow.pop %v1717
        %v1719 = vmul.f32 %v1517, 1.442695
        %v1720 = vpow.pop %v1719
        %v1721 = vmul.f32 %v1518, 1.442695
        %v1722 = vpow.pop %v1721
        %v1723 = vmul.f32 %v1519, 1.442695
        %v1724 = vpow.pop %v1723
        %v1725 = vmul.f32 %v1520, 1.442695
        %v1726 = vpow.pop %v1725
        %v1727 = vmul.f32 %v1521, 1.442695
        %v1728 = vpow.pop %v1727
        %v1729 = vmul.f32 %v1522, 1.442695
        %v1730 = vpow.pop %v1729
        %v1731 = vmul.f32 %v1523, 1.442695
        %v1732 = vpow.pop %v1731
        %v1733 = vmul.f32 %v1524, 1.442695
        %v1734 = vpow.pop %v1733
        %v1735 = vmul.f32 %v1525, 1.442695
        %v1736 = vpow.pop %v1735
        %v1737 = vmul.f32 %v1526, 1.442695
        %v1738 = vpow.pop %v1737
        %v1739 = vmul.f32 %v1527, 1.442695
        %v1740 = vpow.pop %v1739
        %v1741 = vmul.f32 %v1528, 1.442695
        %v1742 = vpow.pop %v1741
        %v1743 = vmul.f32 %v1529, 1.442695
        %v1744 = vpow.pop %v1743
        %v1745 = vmul.f32 %v1530, 1.442695
        %v1746 = vpow.pop %v1745
        %v1747 = vmul.f32 %v1531, 1.442695
        %v1748 = vpow.pop %v1747
        %v1749 = vmul.f32 %v1532, 1.442695
        %v1750 = vpow.pop %v1749
        %v1751 = vmul.f32 %v1533, 1.442695
        %v1752 = vpow.pop %v1751
        %v1753 = vmul.f32 %v1534, 1.442695
        %v1754 = vpow.pop %v1753
        %v1755 = vmul.f32 %v1535, 1.442695
        %v1756 = vpow.pop %v1755
        %v1757 = vmul.f32 %v1536, 1.442695
        %v1758 = vpow.pop %v1757
        %v1759 = vmul.f32 %v1537, 1.442695
        %v1760 = vpow.pop %v1759
        %v1761 = vmul.f32 %v1538, 1.442695
        %v1762 = vpow.pop %v1761
        %v1763 = vmul.f32 %v1539, 1.442695
        %v1764 = vpow.pop %v1763
        %v1765 = vmul.f32 %v1540, 1.442695
        %v1766 = vpow.pop %v1765
        %v1767 = vmul.f32 %v1541, 1.442695
        %v1768 = vpow.pop %v1767
        %v1769 = vmul.f32 %v1542, 1.442695
        %v1770 = vpow.pop %v1769
        %v1771 = vmul.f32 %v1543, 1.442695
        %v1772 = vpow.pop %v1771
        %v1773 = vmul.f32 %v1544, 1.442695
        %v1774 = vpow.pop %v1773
        %v1775 = vmul.f32 %v1545, 1.442695
        %v1776 = vpow.pop %v1775
        %v1777 = vmul.f32 %v1546, 1.442695
        %v1778 = vpow.pop %v1777
        %v1779 = vmul.f32 %v1547, 1.442695
        %v1780 = vpow.pop %v1779
        %v1781 = vmul.f32 %v1548, 1.442695
        %v1782 = vpow.pop %v1781
        %v1783 = vmul.f32 %v1549, 1.442695
        %v1784 = vpow.pop %v1783
        %v1785 = vmul.f32 %v1550, 1.442695
        %v1786 = vpow.pop %v1785
        %v1787 = vmul.f32 %v1551, 1.442695
        %v1788 = vpow.pop %v1787
        %v1789 = vmul.f32 %v1552, 1.442695
        %v1790 = vpow.pop %v1789
        %v1791 = vmul.f32 %v1553, 1.442695
        %v1792 = vpow.pop %v1791
        %v1793 = vmul.f32 %v1554, 1.442695
        %v1794 = vpow.pop %v1793
        %v1795 = vmul.f32 %v1555, 1.442695
        %v1796 = vpow.pop %v1795
        %v1797 = vmul.f32 %v1556, 1.442695
        %v1798 = vpow.pop %v1797
        %v1799 = vmul.f32 %v1557, 1.442695
        %v1800 = vpow.pop %v1799
        %v1801 = vmul.f32 %v1558, 1.442695
        %v1802 = vpow.pop %v1801
        %v1803 = vmul.f32 %v1559, 1.442695
        %v1804 = vpow.pop %v1803
        %v1805 = vmul.f32 %v1560, 1.442695
        %v1806 = vpow.pop %v1805
        %v1807 = vmul.f32 %v1561, 1.442695
        %v1808 = vpow.pop %v1807
        %v1809 = vmul.f32 %v1562, 1.442695
        %v1810 = vpow.pop %v1809
        %v1811 = vmul.f32 %v1563, 1.442695
        %v1812 = vpow.pop %v1811
        %v1813 = vmul.f32 %v1564, 1.442695
        %v1814 = vpow.pop %v1813
        %v1815 = vmul.f32 %v1565, 1.442695
        %v1816 = vpow.pop %v1815
        %v1817 = vmul.f32 %v1566, 1.442695
        %v1818 = vpow.pop %v1817
        %v1819 = vmul.f32 %v1567, 1.442695
        %v1820 = vpow.pop %v1819
        %v1821 = vmul.f32 %v1568, 1.442695
        %v1822 = vpow.pop %v1821
        %v1823 = vmul.f32 %v1569, 1.442695
        %v1824 = vpow.pop %v1823
        %v1825 = vmul.f32 %v1570, 1.442695
        %v1826 = vpow.pop %v1825
        %v1827 = vmul.f32 %v1571, 1.442695
        %v1828 = vpow.pop %v1827
        %v1829 = vmul.f32 %v1572, 1.442695
        %v1830 = vpow.pop %v1829
        %v1831 = vmul.f32 %v1573, 1.442695
        %v1832 = vpow.pop %v1831
        %v1833 = vmul.f32 %v1574, 1.442695
        %v1834 = vpow.pop %v1833
        %v1835 = vmul.f32 %v1575, 1.442695
        %v1836 = vpow.pop %v1835
        %v1837 = vmul.f32 %v1576, 1.442695
        %v1838 = vpow.pop %v1837
        %v1839 = vmul.f32 %v1577, 1.442695
        %v1840 = vpow.pop %v1839
        %v1841 = vmul.f32 %v1578, 1.442695
        %v1842 = vpow.pop %v1841
        %v1843 = vmul.f32 %v1579, 1.442695
        %v1844 = vpow.pop %v1843
        %v1845 = vmul.f32 %v1580, 1.442695
        %v1846 = vpow.pop %v1845
        %v1847 = vmul.f32 %v1581, 1.442695
        %v1848 = vpow.pop %v1847
        %v1849 = vmul.f32 %v1582, 1.442695
        %v1850 = vpow.pop %v1849
        %v1851 = vmul.f32 %v1583, 1.442695
        %v1852 = vpow.pop %v1851
        %v1853 = vmul.f32 %v1584, 1.442695
        %v1854 = vpow.pop %v1853
        %v1855 = vmul.f32 %v1585, 1.442695
        %v1856 = vpow.pop %v1855
        %v1857 = vmul.f32 %v1586, 1.442695
        %v1858 = vpow.pop %v1857
        %v1859 = vmul.f32 %v1587, 1.442695
        %v1860 = vpow.pop %v1859
        %v1861 = vmul.f32 %v1588, 1.442695
        %v1862 = vpow.pop %v1861
        %v1863 = vmul.f32 %v1589, 1.442695
        %v1864 = vpow.pop %v1863
        %v1865 = vmul.f32 %v1590, 1.442695
        %v1866 = vpow.pop %v1865
        %v1867 = vmul.f32 %v1591, 1.442695
        %v1868 = vpow.pop %v1867
        %v1869 = vmul.f32 %v1592, 1.442695
        %v1870 = vpow.pop %v1869
        %v1871 = vmul.f32 %v1593, 1.442695
        %v1872 = vpow.pop %v1871
        %v1873 = vmul.f32 %v1594, 1.442695
        %v1874 = vpow.pop %v1873
        %v1875 = vmul.f32 %v1595, 1.442695
        %v1876 = vpow.pop %v1875
        %v1877 = vmul.f32 %v1596, 1.442695
        %v1878 = vpow.pop %v1877
        %v1879 = vmul.f32 %v1597, 1.442695
        %v1880 = vpow.pop %v1879
        %v1881 = vmul.f32 %v1598, 1.442695
        %v1882 = vpow.pop %v1881
        %v1883 = vmul.f32 %v1599, 1.442695
        %v1884 = vpow.pop %v1883
        %v1885 = vmul.f32 %v1600, 1.442695
        %v1886 = vpow.pop %v1885
        %v1887 = vmul.f32 %v1601, 1.442695
        %v1888 = vpow.pop %v1887
        %v1889 = vmul.f32 %v1602, 1.442695
        %v1890 = vpow.pop %v1889
        %v1891 = vmul.f32 %v1603, 1.442695
        %v1892 = vpow.pop %v1891
        %v1893 = vmul.f32 %v1604, 1.442695
        %v1894 = vpow.pop %v1893
        %v1895 = vmul.f32 %v1605, 1.442695
        %v1896 = vpow.pop %v1895
        %v1897 = vmul.f32 %v1606, 1.442695
        %v1898 = vpow.pop %v1897
        %v1899 = vmul.f32 %v1607, 1.442695
        %v1900 = vpow.pop %v1899
        %v1901 = vmul.f32 %v1608, 1.442695
        %v1902 = vpow.pop %v1901
        %v1903 = vmul.f32 %v1609, 1.442695
        %v1904 = vpow.pop %v1903
        %v1905 = vmul.f32 %v1610, 1.442695
        %v1906 = vpow.pop %v1905
        %v1907 = vmul.f32 %v1611, 1.442695
        %v1908 = vpow.pop %v1907
        %v1909 = vmul.f32 %v1612, 1.442695
        %v1910 = vpow.pop %v1909
        %v1911 = vmul.f32 %v1613, 1.442695
        %v1912 = vpow.pop %v1911
        %v1913 = vmul.f32 %v1614, 1.442695
        %v1914 = vpow.pop %v1913
        %v1915 = vmul.f32 %v1615, 1.442695
        %v1916 = vpow.pop %v1915
        %v1917 = vmul.f32 %v1616, 1.442695
        %v1918 = vpow.pop %v1917
        %v1919 = vmul.f32 %v1617, 1.442695
        %v1920 = vpow.pop %v1919
        %v1921 = vmul.f32 %v1618, 1.442695
        %v1922 = vpow.pop %v1921
        %v1923 = vmul.f32 %v1619, 1.442695
        %v1924 = vpow.pop %v1923
        %v1925 = vmul.f32 %v1620, 1.442695
        %v1926 = vpow.pop %v1925
        %v1927 = vmul.f32 %v1621, 1.442695
        %v1928 = vpow.pop %v1927
        %v1929 = vmul.f32 %v1622, 1.442695
        %v1930 = vpow.pop %v1929
        %v1931 = vmul.f32 %v1623, 1.442695
        %v1932 = vpow.pop %v1931
        %v1933 = vmul.f32 %v1624, 1.442695
        %v1934 = vpow.pop %v1933
        %v1935 = vmul.f32 %v1625, 1.442695
        %v1936 = vpow.pop %v1935
        %v1937 = vmul.f32 %v1626, 1.442695
        %v1938 = vpow.pop %v1937
        %v1939 = vmul.f32 %v1627, 1.442695
        %v1940 = vpow.pop %v1939
        %v1941 = vmul.f32 %v1628, 1.442695
        %v1942 = vpow.pop %v1941
        %v1943 = vmul.f32 %v1629, 1.442695
        %v1944 = vpow.pop %v1943
        %v1945 = vmul.f32 %v1630, 1.442695
        %v1946 = vpow.pop %v1945
        %v1947 = vmul.f32 %v1631, 1.442695
        %v1948 = vpow.pop %v1947
        %v1949 = vmul.f32 %v1632, 1.442695
        %v1950 = vpow.pop %v1949
        %v1951 = vmul.f32 %v1633, 1.442695
        %v1952 = vpow.pop %v1951
        %v1953 = vmul.f32 %v1634, 1.442695
        %v1954 = vpow.pop %v1953
        %v1955 = vmul.f32 %v1635, 1.442695
        %v1956 = vpow.pop %v1955
        %v1957 = vmul.f32 %v1636, 1.442695
        %v1958 = vpow.pop %v1957
        %v1959 = vmul.f32 %v1637, 1.442695
        %v1960 = vpow.pop %v1959
        %v1961 = vmul.f32 %v1638, 1.442695
        %v1962 = vpow.pop %v1961
        %v1963 = vmul.f32 %v1639, 1.442695
        %v1964 = vpow.pop %v1963
        %v1965 = vmul.f32 %v1640, 1.442695
        %v1966 = vpow.pop %v1965
        %v1967 = vmul.f32 %v1641, 1.442695
        %v1968 = vpow.pop %v1967
        %v1969 = vmul.f32 %v1642, 1.442695
        %v1970 = vpow.pop %v1969
        %v1971 = vmul.f32 %v1643, 1.442695
        %v1972 = vpow.pop %v1971
        %v1973 = vmul.f32 %v1644, 1.442695
        %v1974 = vpow.pop %v1973
        %v1975 = vmul.f32 %v1645, 1.442695
        %v1976 = vpow.pop %v1975
        %v1977 = vmul.f32 %v1646, 1.442695
        %v1978 = vpow.pop %v1977
        %v1979 = vmul.f32 %v1647, 1.442695
        %v1980 = vpow.pop %v1979
        %v1981 = vmul.f32 %v1648, 1.442695
        %v1982 = vpow.pop %v1981
        %v1983 = vmul.f32 %v1649, 1.442695
        %v1984 = vpow.pop %v1983
        %v1985 = vmul.f32 %v1650, 1.442695
        %v1986 = vpow.pop %v1985
        %v1987 = vadd.f32 %v1652, 1.0
        %v1988 = vadd.f32 %v1654, 1.0
        %v1989 = vadd.f32 %v1656, 1.0
        %v1990 = vadd.f32 %v1658, 1.0
        %v1991 = vadd.f32 %v1660, 1.0
        %v1992 = vadd.f32 %v1662, 1.0
        %v1993 = vadd.f32 %v1664, 1.0
        %v1994 = vadd.f32 %v1666, 1.0
        %v1995 = vadd.f32 %v1668, 1.0
        %v1996 = vadd.f32 %v1670, 1.0
        %v1997 = vadd.f32 %v1672, 1.0
        %v1998 = vadd.f32 %v1674, 1.0
        %v1999 = vadd.f32 %v1676, 1.0
        %v2000 = vadd.f32 %v1678, 1.0
        %v2001 = vadd.f32 %v1680, 1.0
        %v2002 = vadd.f32 %v1682, 1.0
        %v2003 = vadd.f32 %v1684, 1.0
        %v2004 = vadd.f32 %v1686, 1.0
        %v2005 = vadd.f32 %v1688, 1.0
        %v2006 = vadd.f32 %v1690, 1.0
        %v2007 = vadd.f32 %v1692, 1.0
        %v2008 = vadd.f32 %v1694, 1.0
        %v2009 = vadd.f32 %v1696, 1.0
        %v2010 = vadd.f32 %v1698, 1.0
        %v2011 = vadd.f32 %v1700, 1.0
        %v2012 = vadd.f32 %v1702, 1.0
        %v2013 = vadd.f32 %v1704, 1.0
        %v2014 = vadd.f32 %v1706, 1.0
        %v2015 = vadd.f32 %v1708, 1.0
        %v2016 = vadd.f32 %v1710, 1.0
        %v2017 = vadd.f32 %v1712, 1.0
        %v2018 = vadd.f32 %v1714, 1.0
        %v2019 = vadd.f32 %v1716, 1.0
        %v2020 = vadd.f32 %v1718, 1.0
        %v2021 = vadd.f32 %v1720, 1.0
        %v2022 = vadd.f32 %v1722, 1.0
        %v2023 = vadd.f32 %v1724, 1.0
        %v2024 = vadd.f32 %v1726, 1.0
        %v2025 = vadd.f32 %v1728, 1.0
        %v2026 = vadd.f32 %v1730, 1.0
        %v2027 = vadd.f32 %v1732, 1.0
        %v2028 = vadd.f32 %v1734, 1.0
        %v2029 = vadd.f32 %v1736, 1.0
        %v2030 = vadd.f32 %v1738, 1.0
        %v2031 = vadd.f32 %v1740, 1.0
        %v2032 = vadd.f32 %v1742, 1.0
        %v2033 = vadd.f32 %v1744, 1.0
        %v2034 = vadd.f32 %v1746, 1.0
        %v2035 = vadd.f32 %v1748, 1.0
        %v2036 = vadd.f32 %v1750, 1.0
        %v2037 = vadd.f32 %v1752, 1.0
        %v2038 = vadd.f32 %v1754, 1.0
        %v2039 = vadd.f32 %v1756, 1.0
        %v2040 = vadd.f32 %v1758, 1.0
        %v2041 = vadd.f32 %v1760, 1.0
        %v2042 = vadd.f32 %v1762, 1.0
        %v2043 = vadd.f32 %v1764, 1.0
        %v2044 = vadd.f32 %v1766, 1.0
        %v2045 = vadd.f32 %v1768, 1.0
        %v2046 = vadd.f32 %v1770, 1.0
        %v2047 = vadd.f32 %v1772, 1.0
        %v2048 = vadd.f32 %v1774, 1.0
        %v2049 = vadd.f32 %v1776, 1.0
        %v2050 = vadd.f32 %v1778, 1.0
        %v2051 = vadd.f32 %v1780, 1.0
        %v2052 = vadd.f32 %v1782, 1.0
        %v2053 = vadd.f32 %v1784, 1.0
        %v2054 = vadd.f32 %v1786, 1.0
        %v2055 = vadd.f32 %v1788, 1.0
        %v2056 = vadd.f32 %v1790, 1.0
        %v2057 = vadd.f32 %v1792, 1.0
        %v2058 = vadd.f32 %v1794, 1.0
        %v2059 = vadd.f32 %v1796, 1.0
        %v2060 = vadd.f32 %v1798, 1.0
        %v2061 = vadd.f32 %v1800, 1.0
        %v2062 = vadd.f32 %v1802, 1.0
        %v2063 = vadd.f32 %v1804, 1.0
        %v2064 = vadd.f32 %v1806, 1.0
        %v2065 = vadd.f32 %v1808, 1.0
        %v2066 = vadd.f32 %v1810, 1.0
        %v2067 = vadd.f32 %v1812, 1.0
        %v2068 = vadd.f32 %v1814, 1.0
        %v2069 = vadd.f32 %v1816, 1.0
        %v2070 = vadd.f32 %v1818, 1.0
        %v2071 = vadd.f32 %v1820, 1.0
        %v2072 = vadd.f32 %v1822, 1.0
        %v2073 = vadd.f32 %v1824, 1.0
        %v2074 = vadd.f32 %v1826, 1.0
        %v2075 = vadd.f32 %v1828, 1.0
        %v2076 = vadd.f32 %v1830, 1.0
        %v2077 = vadd.f32 %v1832, 1.0
        %v2078 = vadd.f32 %v1834, 1.0
        %v2079 = vadd.f32 %v1836, 1.0
        %v2080 = vadd.f32 %v1838, 1.0
        %v2081 = vadd.f32 %v1840, 1.0
        %v2082 = vadd.f32 %v1842, 1.0
        %v2083 = vadd.f32 %v1844, 1.0
        %v2084 = vadd.f32 %v1846, 1.0
        %v2085 = vadd.f32 %v1848, 1.0
        %v2086 = vadd.f32 %v1850, 1.0
        %v2087 = vadd.f32 %v1852, 1.0
        %v2088 = vadd.f32 %v1854, 1.0
        %v2089 = vadd.f32 %v1856, 1.0
        %v2090 = vadd.f32 %v1858, 1.0
        %v2091 = vadd.f32 %v1860, 1.0
        %v2092 = vadd.f32 %v1862, 1.0
        %v2093 = vadd.f32 %v1864, 1.0
        %v2094 = vadd.f32 %v1866, 1.0
        %v2095 = vadd.f32 %v1868, 1.0
        %v2096 = vadd.f32 %v1870, 1.0
        %v2097 = vadd.f32 %v1872, 1.0
        %v2098 = vadd.f32 %v1874, 1.0
        %v2099 = vadd.f32 %v1876, 1.0
        %v2100 = vadd.f32 %v1878, 1.0
        %v2101 = vadd.f32 %v1880, 1.0
        %v2102 = vadd.f32 %v1882, 1.0
        %v2103 = vadd.f32 %v1884, 1.0
        %v2104 = vadd.f32 %v1886, 1.0
        %v2105 = vadd.f32 %v1888, 1.0
        %v2106 = vadd.f32 %v1890, 1.0
        %v2107 = vadd.f32 %v1892, 1.0
        %v2108 = vadd.f32 %v1894, 1.0
        %v2109 = vadd.f32 %v1896, 1.0
        %v2110 = vadd.f32 %v1898, 1.0
        %v2111 = vadd.f32 %v1900, 1.0
        %v2112 = vadd.f32 %v1902, 1.0
        %v2113 = vadd.f32 %v1904, 1.0
        %v2114 = vadd.f32 %v1906, 1.0
        %v2115 = vadd.f32 %v1908, 1.0
        %v2116 = vadd.f32 %v1910, 1.0
        %v2117 = vadd.f32 %v1912, 1.0
        %v2118 = vadd.f32 %v1914, 1.0
        %v2119 = vadd.f32 %v1916, 1.0
        %v2120 = vadd.f32 %v1918, 1.0
        %v2121 = vadd.f32 %v1920, 1.0
        %v2122 = vadd.f32 %v1922, 1.0
        %v2123 = vadd.f32 %v1924, 1.0
        %v2124 = vadd.f32 %v1926, 1.0
        %v2125 = vadd.f32 %v1928, 1.0
        %v2126 = vadd.f32 %v1930, 1.0
        %v2127 = vadd.f32 %v1932, 1.0
        %v2128 = vadd.f32 %v1934, 1.0
        %v2129 = vadd.f32 %v1936, 1.0
        %v2130 = vadd.f32 %v1938, 1.0
        %v2131 = vadd.f32 %v1940, 1.0
        %v2132 = vadd.f32 %v1942, 1.0
        %v2133 = vadd.f32 %v1944, 1.0
        %v2134 = vadd.f32 %v1946, 1.0
        %v2135 = vadd.f32 %v1948, 1.0
        %v2136 = vadd.f32 %v1950, 1.0
        %v2137 = vadd.f32 %v1952, 1.0
        %v2138 = vadd.f32 %v1954, 1.0
        %v2139 = vadd.f32 %v1956, 1.0
        %v2140 = vadd.f32 %v1958, 1.0
        %v2141 = vadd.f32 %v1960, 1.0
        %v2142 = vadd.f32 %v1962, 1.0
        %v2143 = vadd.f32 %v1964, 1.0
        %v2144 = vadd.f32 %v1966, 1.0
        %v2145 = vadd.f32 %v1968, 1.0
        %v2146 = vadd.f32 %v1970, 1.0
        %v2147 = vadd.f32 %v1972, 1.0
        %v2148 = vadd.f32 %v1974, 1.0
        %v2149 = vadd.f32 %v1976, 1.0
        %v2150 = vadd.f32 %v1978, 1.0
        %v2151 = vadd.f32 %v1980, 1.0
        %v2152 = vadd.f32 %v1982, 1.0
        %v2153 = vadd.f32 %v1984, 1.0
        %v2154 = vadd.f32 %v1986, 1.0
        %v2155 = vrcp.pop %v1987
        %v2156 = vmul.f32 1.0, %v2155
        %v2157 = vrcp.pop %v1988
        %v2158 = vmul.f32 1.0, %v2157
        %v2159 = vrcp.pop %v1989
        %v2160 = vmul.f32 1.0, %v2159
        %v2161 = vrcp.pop %v1990
        %v2162 = vmul.f32 1.0, %v2161
        %v2163 = vrcp.pop %v1991
        %v2164 = vmul.f32 1.0, %v2163
        %v2165 = vrcp.pop %v1992
        %v2166 = vmul.f32 1.0, %v2165
        %v2167 = vrcp.pop %v1993
        %v2168 = vmul.f32 1.0, %v2167
        %v2169 = vrcp.pop %v1994
        %v2170 = vmul.f32 1.0, %v2169
        %v2171 = vrcp.pop %v1995
        %v2172 = vmul.f32 1.0, %v2171
        %v2173 = vrcp.pop %v1996
        %v2174 = vmul.f32 1.0, %v2173
        %v2175 = vrcp.pop %v1997
        %v2176 = vmul.f32 1.0, %v2175
        %v2177 = vrcp.pop %v1998
        %v2178 = vmul.f32 1.0, %v2177
        %v2179 = vrcp.pop %v1999
        %v2180 = vmul.f32 1.0, %v2179
        %v2181 = vrcp.pop %v2000
        %v2182 = vmul.f32 1.0, %v2181
        %v2183 = vrcp.pop %v2001
        %v2184 = vmul.f32 1.0, %v2183
        %v2185 = vrcp.pop %v2002
        %v2186 = vmul.f32 1.0, %v2185
        %v2187 = vrcp.pop %v2003
        %v2188 = vmul.f32 1.0, %v2187
        %v2189 = vrcp.pop %v2004
        %v2190 = vmul.f32 1.0, %v2189
        %v2191 = vrcp.pop %v2005
        %v2192 = vmul.f32 1.0, %v2191
        %v2193 = vrcp.pop %v2006
        %v2194 = vmul.f32 1.0, %v2193
        %v2195 = vrcp.pop %v2007
        %v2196 = vmul.f32 1.0, %v2195
        %v2197 = vrcp.pop %v2008
        %v2198 = vmul.f32 1.0, %v2197
        %v2199 = vrcp.pop %v2009
        %v2200 = vmul.f32 1.0, %v2199
        %v2201 = vrcp.pop %v2010
        %v2202 = vmul.f32 1.0, %v2201
        %v2203 = vrcp.pop %v2011
        %v2204 = vmul.f32 1.0, %v2203
        %v2205 = vrcp.pop %v2012
        %v2206 = vmul.f32 1.0, %v2205
        %v2207 = vrcp.pop %v2013
        %v2208 = vmul.f32 1.0, %v2207
        %v2209 = vrcp.pop %v2014
        %v2210 = vmul.f32 1.0, %v2209
        %v2211 = vrcp.pop %v2015
        %v2212 = vmul.f32 1.0, %v2211
        %v2213 = vrcp.pop %v2016
        %v2214 = vmul.f32 1.0, %v2213
        %v2215 = vrcp.pop %v2017
        %v2216 = vmul.f32 1.0, %v2215
        %v2217 = vrcp.pop %v2018
        %v2218 = vmul.f32 1.0, %v2217
        %v2219 = vrcp.pop %v2019
        %v2220 = vmul.f32 1.0, %v2219
        %v2221 = vrcp.pop %v2020
        %v2222 = vmul.f32 1.0, %v2221
        %v2223 = vrcp.pop %v2021
        %v2224 = vmul.f32 1.0, %v2223
        %v2225 = vrcp.pop %v2022
        %v2226 = vmul.f32 1.0, %v2225
        %v2227 = vrcp.pop %v2023
        %v2228 = vmul.f32 1.0, %v2227
        %v2229 = vrcp.pop %v2024
        %v2230 = vmul.f32 1.0, %v2229
        %v2231 = vrcp.pop %v2025
        %v2232 = vmul.f32 1.0, %v2231
        %v2233 = vrcp.pop %v2026
        %v2234 = vmul.f32 1.0, %v2233
        %v2235 = vrcp.pop %v2027
        %v2236 = vmul.f32 1.0, %v2235
        %v2237 = vrcp.pop %v2028
        %v2238 = vmul.f32 1.0, %v2237
        %v2239 = vrcp.pop %v2029
        %v2240 = vmul.f32 1.0, %v2239
        %v2241 = vrcp.pop %v2030
        %v2242 = vmul.f32 1.0, %v2241
        %v2243 = vrcp.pop %v2031
        %v2244 = vmul.f32 1.0, %v2243
        %v2245 = vrcp.pop %v2032
        %v2246 = vmul.f32 1.0, %v2245
        %v2247 = vrcp.pop %v2033
        %v2248 = vmul.f32 1.0, %v2247
        %v2249 = vrcp.pop %v2034
        %v2250 = vmul.f32 1.0, %v2249
        %v2251 = vrcp.pop %v2035
        %v2252 = vmul.f32 1.0, %v2251
        %v2253 = vrcp.pop %v2036
        %v2254 = vmul.f32 1.0, %v2253
        %v2255 = vrcp.pop %v2037
        %v2256 = vmul.f32 1.0, %v2255
        %v2257 = vrcp.pop %v2038
        %v2258 = vmul.f32 1.0, %v2257
        %v2259 = vrcp.pop %v2039
        %v2260 = vmul.f32 1.0, %v2259
        %v2261 = vrcp.pop %v2040
        %v2262 = vmul.f32 1.0, %v2261
        %v2263 = vrcp.pop %v2041
        %v2264 = vmul.f32 1.0, %v2263
        %v2265 = vrcp.pop %v2042
        %v2266 = vmul.f32 1.0, %v2265
        %v2267 = vrcp.pop %v2043
        %v2268 = vmul.f32 1.0, %v2267
        %v2269 = vrcp.pop %v2044
        %v2270 = vmul.f32 1.0, %v2269
        %v2271 = vrcp.pop %v2045
        %v2272 = vmul.f32 1.0, %v2271
        %v2273 = vrcp.pop %v2046
        %v2274 = vmul.f32 1.0, %v2273
        %v2275 = vrcp.pop %v2047
        %v2276 = vmul.f32 1.0, %v2275
        %v2277 = vrcp.pop %v2048
        %v2278 = vmul.f32 1.0, %v2277
        %v2279 = vrcp.pop %v2049
        %v2280 = vmul.f32 1.0, %v2279
        %v2281 = vrcp.pop %v2050
        %v2282 = vmul.f32 1.0, %v2281
        %v2283 = vrcp.pop %v2051
        %v2284 = vmul.f32 1.0, %v2283
        %v2285 = vrcp.pop %v2052
        %v2286 = vmul.f32 1.0, %v2285
        %v2287 = vrcp.pop %v2053
        %v2288 = vmul.f32 1.0, %v2287
        %v2289 = vrcp.pop %v2054
        %v2290 = vmul.f32 1.0, %v2289
        %v2291 = vrcp.pop %v2055
        %v2292 = vmul.f32 1.0, %v2291
        %v2293 = vrcp.pop %v2056
        %v2294 = vmul.f32 1.0, %v2293
        %v2295 = vrcp.pop %v2057
        %v2296 = vmul.f32 1.0, %v2295
        %v2297 = vrcp.pop %v2058
        %v2298 = vmul.f32 1.0, %v2297
        %v2299 = vrcp.pop %v2059
        %v2300 = vmul.f32 1.0, %v2299
        %v2301 = vrcp.pop %v2060
        %v2302 = vmul.f32 1.0, %v2301
        %v2303 = vrcp.pop %v2061
        %v2304 = vmul.f32 1.0, %v2303
        %v2305 = vrcp.pop %v2062
        %v2306 = vmul.f32 1.0, %v2305
        %v2307 = vrcp.pop %v2063
        %v2308 = vmul.f32 1.0, %v2307
        %v2309 = vrcp.pop %v2064
        %v2310 = vmul.f32 1.0, %v2309
        %v2311 = vrcp.pop %v2065
        %v2312 = vmul.f32 1.0, %v2311
        %v2313 = vrcp.pop %v2066
        %v2314 = vmul.f32 1.0, %v2313
        %v2315 = vrcp.pop %v2067
        %v2316 = vmul.f32 1.0, %v2315
        %v2317 = vrcp.pop %v2068
        %v2318 = vmul.f32 1.0, %v2317
        %v2319 = vrcp.pop %v2069
        %v2320 = vmul.f32 1.0, %v2319
        %v2321 = vrcp.pop %v2070
        %v2322 = vmul.f32 1.0, %v2321
        %v2323 = vrcp.pop %v2071
        %v2324 = vmul.f32 1.0, %v2323
        %v2325 = vrcp.pop %v2072
        %v2326 = vmul.f32 1.0, %v2325
        %v2327 = vrcp.pop %v2073
        %v2328 = vmul.f32 1.0, %v2327
        %v2329 = vrcp.pop %v2074
        %v2330 = vmul.f32 1.0, %v2329
        %v2331 = vrcp.pop %v2075
        %v2332 = vmul.f32 1.0, %v2331
        %v2333 = vrcp.pop %v2076
        %v2334 = vmul.f32 1.0, %v2333
        %v2335 = vrcp.pop %v2077
        %v2336 = vmul.f32 1.0, %v2335
        %v2337 = vrcp.pop %v2078
        %v2338 = vmul.f32 1.0, %v2337
        %v2339 = vrcp.pop %v2079
        %v2340 = vmul.f32 1.0, %v2339
        %v2341 = vrcp.pop %v2080
        %v2342 = vmul.f32 1.0, %v2341
        %v2343 = vrcp.pop %v2081
        %v2344 = vmul.f32 1.0, %v2343
        %v2345 = vrcp.pop %v2082
        %v2346 = vmul.f32 1.0, %v2345
        %v2347 = vrcp.pop %v2083
        %v2348 = vmul.f32 1.0, %v2347
        %v2349 = vrcp.pop %v2084
        %v2350 = vmul.f32 1.0, %v2349
        %v2351 = vrcp.pop %v2085
        %v2352 = vmul.f32 1.0, %v2351
        %v2353 = vrcp.pop %v2086
        %v2354 = vmul.f32 1.0, %v2353
        %v2355 = vrcp.pop %v2087
        %v2356 = vmul.f32 1.0, %v2355
        %v2357 = vrcp.pop %v2088
        %v2358 = vmul.f32 1.0, %v2357
        %v2359 = vrcp.pop %v2089
        %v2360 = vmul.f32 1.0, %v2359
        %v2361 = vrcp.pop %v2090
        %v2362 = vmul.f32 1.0, %v2361
        %v2363 = vrcp.pop %v2091
        %v2364 = vmul.f32 1.0, %v2363
        %v2365 = vrcp.pop %v2092
        %v2366 = vmul.f32 1.0, %v2365
        %v2367 = vrcp.pop %v2093
        %v2368 = vmul.f32 1.0, %v2367
        %v2369 = vrcp.pop %v2094
        %v2370 = vmul.f32 1.0, %v2369
        %v2371 = vrcp.pop %v2095
        %v2372 = vmul.f32 1.0, %v2371
        %v2373 = vrcp.pop %v2096
        %v2374 = vmul.f32 1.0, %v2373
        %v2375 = vrcp.pop %v2097
        %v2376 = vmul.f32 1.0, %v2375
        %v2377 = vrcp.pop %v2098
        %v2378 = vmul.f32 1.0, %v2377
        %v2379 = vrcp.pop %v2099
        %v2380 = vmul.f32 1.0, %v2379
        %v2381 = vrcp.pop %v2100
        %v2382 = vmul.f32 1.0, %v2381
        %v2383 = vrcp.pop %v2101
        %v2384 = vmul.f32 1.0, %v2383
        %v2385 = vrcp.pop %v2102
        %v2386 = vmul.f32 1.0, %v2385
        %v2387 = vrcp.pop %v2103
        %v2388 = vmul.f32 1.0, %v2387
        %v2389 = vrcp.pop %v2104
        %v2390 = vmul.f32 1.0, %v2389
        %v2391 = vrcp.pop %v2105
        %v2392 = vmul.f32 1.0, %v2391
        %v2393 = vrcp.pop %v2106
        %v2394 = vmul.f32 1.0, %v2393
        %v2395 = vrcp.pop %v2107
        %v2396 = vmul.f32 1.0, %v2395
        %v2397 = vrcp.pop %v2108
        %v2398 = vmul.f32 1.0, %v2397
        %v2399 = vrcp.pop %v2109
        %v2400 = vmul.f32 1.0, %v2399
        %v2401 = vrcp.pop %v2110
        %v2402 = vmul.f32 1.0, %v2401
        %v2403 = vrcp.pop %v2111
        %v2404 = vmul.f32 1.0, %v2403
        %v2405 = vrcp.pop %v2112
        %v2406 = vmul.f32 1.0, %v2405
        %v2407 = vrcp.pop %v2113
        %v2408 = vmul.f32 1.0, %v2407
        %v2409 = vrcp.pop %v2114
        %v2410 = vmul.f32 1.0, %v2409
        %v2411 = vrcp.pop %v2115
        %v2412 = vmul.f32 1.0, %v2411
        %v2413 = vrcp.pop %v2116
        %v2414 = vmul.f32 1.0, %v2413
        %v2415 = vrcp.pop %v2117
        %v2416 = vmul.f32 1.0, %v2415
        %v2417 = vrcp.pop %v2118
        %v2418 = vmul.f32 1.0, %v2417
        %v2419 = vrcp.pop %v2119
        %v2420 = vmul.f32 1.0, %v2419
        %v2421 = vrcp.pop %v2120
        %v2422 = vmul.f32 1.0, %v2421
        %v2423 = vrcp.pop %v2121
        %v2424 = vmul.f32 1.0, %v2423
        %v2425 = vrcp.pop %v2122
        %v2426 = vmul.f32 1.0, %v2425
        %v2427 = vrcp.pop %v2123
        %v2428 = vmul.f32 1.0, %v2427
        %v2429 = vrcp.pop %v2124
        %v2430 = vmul.f32 1.0, %v2429
        %v2431 = vrcp.pop %v2125
        %v2432 = vmul.f32 1.0, %v2431
        %v2433 = vrcp.pop %v2126
        %v2434 = vmul.f32 1.0, %v2433
        %v2435 = vrcp.pop %v2127
        %v2436 = vmul.f32 1.0, %v2435
        %v2437 = vrcp.pop %v2128
        %v2438 = vmul.f32 1.0, %v2437
        %v2439 = vrcp.pop %v2129
        %v2440 = vmul.f32 1.0, %v2439
        %v2441 = vrcp.pop %v2130
        %v2442 = vmul.f32 1.0, %v2441
        %v2443 = vrcp.pop %v2131
        %v2444 = vmul.f32 1.0, %v2443
        %v2445 = vrcp.pop %v2132
        %v2446 = vmul.f32 1.0, %v2445
        %v2447 = vrcp.pop %v2133
        %v2448 = vmul.f32 1.0, %v2447
        %v2449 = vrcp.pop %v2134
        %v2450 = vmul.f32 1.0, %v2449
        %v2451 = vrcp.pop %v2135
        %v2452 = vmul.f32 1.0, %v2451
        %v2453 = vrcp.pop %v2136
        %v2454 = vmul.f32 1.0, %v2453
        %v2455 = vrcp.pop %v2137
        %v2456 = vmul.f32 1.0, %v2455
        %v2457 = vrcp.pop %v2138
        %v2458 = vmul.f32 1.0, %v2457
        %v2459 = vrcp.pop %v2139
        %v2460 = vmul.f32 1.0, %v2459
        %v2461 = vrcp.pop %v2140
        %v2462 = vmul.f32 1.0, %v2461
        %v2463 = vrcp.pop %v2141
        %v2464 = vmul.f32 1.0, %v2463
        %v2465 = vrcp.pop %v2142
        %v2466 = vmul.f32 1.0, %v2465
        %v2467 = vrcp.pop %v2143
        %v2468 = vmul.f32 1.0, %v2467
        %v2469 = vrcp.pop %v2144
        %v2470 = vmul.f32 1.0, %v2469
        %v2471 = vrcp.pop %v2145
        %v2472 = vmul.f32 1.0, %v2471
        %v2473 = vrcp.pop %v2146
        %v2474 = vmul.f32 1.0, %v2473
        %v2475 = vrcp.pop %v2147
        %v2476 = vmul.f32 1.0, %v2475
        %v2477 = vrcp.pop %v2148
        %v2478 = vmul.f32 1.0, %v2477
        %v2479 = vrcp.pop %v2149
        %v2480 = vmul.f32 1.0, %v2479
        %v2481 = vrcp.pop %v2150
        %v2482 = vmul.f32 1.0, %v2481
        %v2483 = vrcp.pop %v2151
        %v2484 = vmul.f32 1.0, %v2483
        %v2485 = vrcp.pop %v2152
        %v2486 = vmul.f32 1.0, %v2485
        %v2487 = vrcp.pop %v2153
        %v2488 = vmul.f32 1.0, %v2487
        %v2489 = vrcp.pop %v2154
        %v2490 = vmul.f32 1.0, %v2489
        %v2491 = vmul.f32 %v636, %v2156
        %v2492 = vmul.f32 %v638, %v2158
        %v2493 = vmul.f32 %v699, %v2160
        %v2494 = vmul.f32 %v701, %v2162
        %v2495 = vmul.f32 %v762, %v2164
        %v2496 = vmul.f32 %v764, %v2166
        %v2497 = vmul.f32 %v825, %v2168
        %v2498 = vmul.f32 %v827, %v2170
        %v2499 = vmul.f32 %v888, %v2172
        %v2500 = vmul.f32 %v890, %v2174
        %v2501 = vmul.f32 %v951, %v2176
        %v2502 = vmul.f32 %v953, %v2178
        %v2503 = vmul.f32 %v1014, %v2180
        %v2504 = vmul.f32 %v1016, %v2182
        %v2505 = vmul.f32 %v1077, %v2184
        %v2506 = vmul.f32 %v1079, %v2186
        %v2507 = vmul.f32 %v1140, %v2188
        %v2508 = vmul.f32 %v1142, %v2190
        %v2509 = vmul.f32 %v1203, %v2192
        %v2510 = vmul.f32 %v1205, %v2194
        %v2511 = vmul.f32 %v1266, %v2196
        %v2512 = vmul.f32 %v1268, %v2198
        %v2513 = vmul.f32 %v1329, %v2200
        %v2514 = vmul.f32 %v1331, %v2202
        %v2515 = vmul.f32 %v1392, %v2204
        %v2516 = vmul.f32 %v1394, %v2206
        %v2517 = vmul.f32 %v1455, %v2208
        %v2518 = vmul.f32 %v1457, %v2210
        %v2519 = vmul.f32 %v640, %v2212
        %v2520 = vmul.f32 %v642, %v2214
        %v2521 = vmul.f32 %v703, %v2216
        %v2522 = vmul.f32 %v705, %v2218
        %v2523 = vmul.f32 %v766, %v2220
        %v2524 = vmul.f32 %v768, %v2222
        %v2525 = vmul.f32 %v829, %v2224
        %v2526 = vmul.f32 %v831, %v2226
        %v2527 = vmul.f32 %v892, %v2228
        %v2528 = vmul.f32 %v894, %v2230
        %v2529 = vmul.f32 %v955, %v2232
        %v2530 = vmul.f32 %v957, %v2234
        %v2531 = vmul.f32 %v1018, %v2236
        %v2532 = vmul.f32 %v1020, %v2238
        %v2533 = vmul.f32 %v1081, %v2240
        %v2534 = vmul.f32 %v1083, %v2242
        %v2535 = vmul.f32 %v1144, %v2244
        %v2536 = vmul.f32 %v1146, %v2246
        %v2537 = vmul.f32 %v1207, %v2248
        %v2538 = vmul.f32 %v1209, %v2250
        %v2539 = vmul.f32 %v1270, %v2252
        %v2540 = vmul.f32 %v1272, %v2254
        %v2541 = vmul.f32 %v1333, %v2256
        %v2542 = vmul.f32 %v1335, %v2258
        %v2543 = vmul.f32 %v1396, %v2260
        %v2544 = vmul.f32 %v1398, %v2262
        %v2545 = vmul.f32 %v1459, %v2264
        %v2546 = vmul.f32 %v1461, %v2266
        %v2547 = vmul.f32 %v646, %v2268
        %v2548 = vmul.f32 %v648, %v2270
        %v2549 = vmul.f32 %v709, %v2272
        %v2550 = vmul.f32 %v711, %v2274
        %v2551 = vmul.f32 %v772, %v2276
        %v2552 = vmul.f32 %v774, %v2278
        %v2553 = vmul.f32 %v835, %v2280
        %v2554 = vmul.f32 %v837, %v2282
        %v2555 = vmul.f32 %v898, %v2284
        %v2556 = vmul.f32 %v900, %v2286
        %v2557 = vmul.f32 %v961, %v2288
        %v2558 = vmul.f32 %v963, %v2290
        %v2559 = vmul.f32 %v1024, %v2292
        %v2560 = vmul.f32 %v1026, %v2294
        %v2561 = vmul.f32 %v1087, %v2296
        %v2562 = vmul.f32 %v1089, %v2298
        %v2563 = vmul.f32 %v1150, %v2300
        %v2564 = vmul.f32 %v1152, %v2302
        %v2565 = vmul.f32 %v1213, %v2304
        %v2566 = vmul.f32 %v1215, %v2306
        %v2567 = vmul.f32 %v1276, %v2308
        %v2568 = vmul.f32 %v1278, %v2310
        %v2569 = vmul.f32 %v1339, %v2312
        %v2570 = vmul.f32 %v1341, %v2314
        %v2571 = vmul.f32 %v1402, %v2316
        %v2572 = vmul.f32 %v1404, %v2318
        %v2573 = vmul.f32 %v1465, %v2320
        %v2574 = vmul.f32 %v1467, %v2322
        %v2575 = vmul.f32 %v650, %v2324
        %v2576 = vmul.f32 %v652, %v2326
        %v2577 = vmul.f32 %v713, %v2328
        %v2578 = vmul.f32 %v715, %v2330
        %v2579 = vmul.f32 %v776, %v2332
        %v2580 = vmul.f32 %v778, %v2334
        %v2581 = vmul.f32 %v839, %v2336
        %v2582 = vmul.f32 %v841, %v2338
        %v2583 = vmul.f32 %v902, %v2340
        %v2584 = vmul.f32 %v904, %v2342
        %v2585 = vmul.f32 %v965, %v2344
        %v2586 = vmul.f32 %v967, %v2346
        %v2587 = vmul.f32 %v1028, %v2348
        %v2588 = vmul.f32 %v1030, %v2350
        %v2589 = vmul.f32 %v1091, %v2352
        %v2590 = vmul.f32 %v1093, %v2354
        %v2591 = vmul.f32 %v1154, %v2356
        %v2592 = vmul.f32 %v1156, %v2358
        %v2593 = vmul.f32 %v1217, %v2360
        %v2594 = vmul.f32 %v1219, %v2362
        %v2595 = vmul.f32 %v1280, %v2364
        %v2596 = vmul.f32 %v1282, %v2366
        %v2597 = vmul.f32 %v1343, %v2368
        %v2598 = vmul.f32 %v1345, %v2370
        %v2599 = vmul.f32 %v1406, %v2372
        %v2600 = vmul.f32 %v1408, %v2374
        %v2601 = vmul.f32 %v1469, %v2376
        %v2602 = vmul.f32 %v1471, %v2378
        %v2603 = vmul.f32 %v656, %v2380
        %v2604 = vmul.f32 %v658, %v2382
        %v2605 = vmul.f32 %v719, %v2384
        %v2606 = vmul.f32 %v721, %v2386
        %v2607 = vmul.f32 %v782, %v2388
        %v2608 = vmul.f32 %v784, %v2390
        %v2609 = vmul.f32 %v845, %v2392
        %v2610 = vmul.f32 %v847, %v2394
        %v2611 = vmul.f32 %v908, %v2396
        %v2612 = vmul.f32 %v910, %v2398
        %v2613 = vmul.f32 %v971, %v2400
        %v2614 = vmul.f32 %v973, %v2402
        %v2615 = vmul.f32 %v1034, %v2404
        %v2616 = vmul.f32 %v1036, %v2406
        %v2617 = vmul.f32 %v1097, %v2408
        %v2618 = vmul.f32 %v1099, %v2410
        %v2619 = vmul.f32 %v1160, %v2412
        %v2620 = vmul.f32 %v1162, %v2414
        %v2621 = vmul.f32 %v1223, %v2416
        %v2622 = vmul.f32 %v1225, %v2418
        %v2623 = vmul.f32 %v1286, %v2420
        %v2624 = vmul.f32 %v1288, %v2422
        %v2625 = vmul.f32 %v1349, %v2424
        %v2626 = vmul.f32 %v1351, %v2426
        %v2627 = vmul.f32 %v1412, %v2428
        %v2628 = vmul.f32 %v1414, %v2430
        %v2629 = vmul.f32 %v1475, %v2432
        %v2630 = vmul.f32 %v1477, %v2434
        %v2631 = vmul.f32 %v660, %v2436
        %v2632 = vmul.f32 %v662, %v2438
        %v2633 = vmul.f32 %v723, %v2440
        %v2634 = vmul.f32 %v725, %v2442
        %v2635 = vmul.f32 %v786, %v2444
        %v2636 = vmul.f32 %v788, %v2446
        %v2637 = vmul.f32 %v849, %v2448
        %v2638 = vmul.f32 %v851, %v2450
        %v2639 = vmul.f32 %v912, %v2452
        %v2640 = vmul.f32 %v914, %v2454
        %v2641 = vmul.f32 %v975, %v2456
        %v2642 = vmul.f32 %v977, %v2458
        %v2643 = vmul.f32 %v1038, %v2460
        %v2644 = vmul.f32 %v1040, %v2462
        %v2645 = vmul.f32 %v1101, %v2464
        %v2646 = vmul.f32 %v1103, %v2466
        %v2647 = vmul.f32 %v1164, %v2468
        %v2648 = vmul.f32 %v1166, %v2470
        %v2649 = vmul.f32 %v1227, %v2472
        %v2650 = vmul.f32 %v1229, %v2474
        %v2651 = vmul.f32 %v1290, %v2476
        %v2652 = vmul.f32 %v1292, %v2478
        %v2653 = vmul.f32 %v1353, %v2480
        %v2654 = vmul.f32 %v1355, %v2482
        %v2655 = vmul.f32 %v1416, %v2484
        %v2656 = vmul.f32 %v1418, %v2486
        %v2657 = vmul.f32 %v1479, %v2488
        %v2658 = vmul.f32 %v1481, %v2490
        %v2659 = vadd.f32 %v2491, %v2492
        %v2660 = vadd.f32 %v2659, %v2493
        %v2661 = vadd.f32 %v2660, %v2494
        %v2662 = vadd.f32 %v2661, %v2495
        %v2663 = vadd.f32 %v2662, %v2496
        %v2664 = vadd.f32 %v2663, %v2497
        %v2665 = vadd.f32 %v2664, %v2498
        %v2666 = vadd.f32 %v2665, %v2499
        %v2667 = vadd.f32 %v2666, %v2500
        %v2668 = vadd.f32 %v2667, %v2501
        %v2669 = vadd.f32 %v2668, %v2502
        %v2670 = vadd.f32 %v2669, %v2503
        %v2671 = vadd.f32 %v2670, %v2504
        %v2672 = vadd.f32 %v2671, %v2505
        %v2673 = vadd.f32 %v2672, %v2506
        %v2674 = vadd.f32 %v2673, %v2507
        %v2675 = vadd.f32 %v2674, %v2508
        %v2676 = vadd.f32 %v2675, %v2509
        %v2677 = vadd.f32 %v2676, %v2510
        %v2678 = vadd.f32 %v2677, %v2511
        %v2679 = vadd.f32 %v2678, %v2512
        %v2680 = vadd.f32 %v2679, %v2513
        %v2681 = vadd.f32 %v2680, %v2514
        %v2682 = vadd.f32 %v2681, %v2515
        %v2683 = vadd.f32 %v2682, %v2516
        %v2684 = vadd.f32 %v2683, %v2517
        %v2685 = vadd.f32 %v2684, %v2518
        %2686 = vadd.xlane.f32.xlu0 %v2685
        %v2687 = vpop.xlane.xlu0 %2686
        %v2688 = vadd.f32 %v2519, %v2520
        %v2689 = vadd.f32 %v2688, %v2521
        %v2690 = vadd.f32 %v2689, %v2522
        %v2691 = vadd.f32 %v2690, %v2523
        %v2692 = vadd.f32 %v2691, %v2524
        %v2693 = vadd.f32 %v2692, %v2525
        %v2694 = vadd.f32 %v2693, %v2526
        %v2695 = vadd.f32 %v2694, %v2527
        %v2696 = vadd.f32 %v2695, %v2528
        %v2697 = vadd.f32 %v2696, %v2529
        %v2698 = vadd.f32 %v2697, %v2530
        %v2699 = vadd.f32 %v2698, %v2531
        %v2700 = vadd.f32 %v2699, %v2532
        %v2701 = vadd.f32 %v2700, %v2533
        %v2702 = vadd.f32 %v2701, %v2534
        %v2703 = vadd.f32 %v2702, %v2535
        %v2704 = vadd.f32 %v2703, %v2536
        %v2705 = vadd.f32 %v2704, %v2537
        %v2706 = vadd.f32 %v2705, %v2538
        %v2707 = vadd.f32 %v2706, %v2539
        %v2708 = vadd.f32 %v2707, %v2540
        %v2709 = vadd.f32 %v2708, %v2541
        %v2710 = vadd.f32 %v2709, %v2542
        %v2711 = vadd.f32 %v2710, %v2543
        %v2712 = vadd.f32 %v2711, %v2544
        %v2713 = vadd.f32 %v2712, %v2545
        %v2714 = vadd.f32 %v2713, %v2546
        %2715 = vadd.xlane.f32.xlu0 %v2714
        %v2716 = vpop.xlane.xlu0 %2715
        %v2717 = vadd.f32 %v2547, %v2548
        %v2718 = vadd.f32 %v2717, %v2549
        %v2719 = vadd.f32 %v2718, %v2550
        %v2720 = vadd.f32 %v2719, %v2551
        %v2721 = vadd.f32 %v2720, %v2552
        %v2722 = vadd.f32 %v2721, %v2553
        %v2723 = vadd.f32 %v2722, %v2554
        %v2724 = vadd.f32 %v2723, %v2555
        %v2725 = vadd.f32 %v2724, %v2556
        %v2726 = vadd.f32 %v2725, %v2557
        %v2727 = vadd.f32 %v2726, %v2558
        %v2728 = vadd.f32 %v2727, %v2559
        %v2729 = vadd.f32 %v2728, %v2560
        %v2730 = vadd.f32 %v2729, %v2561
        %v2731 = vadd.f32 %v2730, %v2562
        %v2732 = vadd.f32 %v2731, %v2563
        %v2733 = vadd.f32 %v2732, %v2564
        %v2734 = vadd.f32 %v2733, %v2565
        %v2735 = vadd.f32 %v2734, %v2566
        %v2736 = vadd.f32 %v2735, %v2567
        %v2737 = vadd.f32 %v2736, %v2568
        %v2738 = vadd.f32 %v2737, %v2569
        %v2739 = vadd.f32 %v2738, %v2570
        %v2740 = vadd.f32 %v2739, %v2571
        %v2741 = vadd.f32 %v2740, %v2572
        %v2742 = vadd.f32 %v2741, %v2573
        %v2743 = vadd.f32 %v2742, %v2574
        %2744 = vadd.xlane.f32.xlu0 %v2743
        %v2745 = vpop.xlane.xlu0 %2744
        %v2746 = vadd.f32 %v2575, %v2576
        %v2747 = vadd.f32 %v2746, %v2577
        %v2748 = vadd.f32 %v2747, %v2578
        %v2749 = vadd.f32 %v2748, %v2579
        %v2750 = vadd.f32 %v2749, %v2580
        %v2751 = vadd.f32 %v2750, %v2581
        %v2752 = vadd.f32 %v2751, %v2582
        %v2753 = vadd.f32 %v2752, %v2583
        %v2754 = vadd.f32 %v2753, %v2584
        %v2755 = vadd.f32 %v2754, %v2585
        %v2756 = vadd.f32 %v2755, %v2586
        %v2757 = vadd.f32 %v2756, %v2587
        %v2758 = vadd.f32 %v2757, %v2588
        %v2759 = vadd.f32 %v2758, %v2589
        %v2760 = vadd.f32 %v2759, %v2590
        %v2761 = vadd.f32 %v2760, %v2591
        %v2762 = vadd.f32 %v2761, %v2592
        %v2763 = vadd.f32 %v2762, %v2593
        %v2764 = vadd.f32 %v2763, %v2594
        %v2765 = vadd.f32 %v2764, %v2595
        %v2766 = vadd.f32 %v2765, %v2596
        %v2767 = vadd.f32 %v2766, %v2597
        %v2768 = vadd.f32 %v2767, %v2598
        %v2769 = vadd.f32 %v2768, %v2599
        %v2770 = vadd.f32 %v2769, %v2600
        %v2771 = vadd.f32 %v2770, %v2601
        %v2772 = vadd.f32 %v2771, %v2602
        %2773 = vadd.xlane.f32.xlu0 %v2772
        %v2774 = vpop.xlane.xlu0 %2773
        %v2775 = vadd.f32 %v2603, %v2604
        %v2776 = vadd.f32 %v2775, %v2605
        %v2777 = vadd.f32 %v2776, %v2606
        %v2778 = vadd.f32 %v2777, %v2607
        %v2779 = vadd.f32 %v2778, %v2608
        %v2780 = vadd.f32 %v2779, %v2609
        %v2781 = vadd.f32 %v2780, %v2610
        %v2782 = vadd.f32 %v2781, %v2611
        %v2783 = vadd.f32 %v2782, %v2612
        %v2784 = vadd.f32 %v2783, %v2613
        %v2785 = vadd.f32 %v2784, %v2614
        %v2786 = vadd.f32 %v2785, %v2615
        %v2787 = vadd.f32 %v2786, %v2616
        %v2788 = vadd.f32 %v2787, %v2617
        %v2789 = vadd.f32 %v2788, %v2618
        %v2790 = vadd.f32 %v2789, %v2619
        %v2791 = vadd.f32 %v2790, %v2620
        %v2792 = vadd.f32 %v2791, %v2621
        %v2793 = vadd.f32 %v2792, %v2622
        %v2794 = vadd.f32 %v2793, %v2623
        %v2795 = vadd.f32 %v2794, %v2624
        %v2796 = vadd.f32 %v2795, %v2625
        %v2797 = vadd.f32 %v2796, %v2626
        %v2798 = vadd.f32 %v2797, %v2627
        %v2799 = vadd.f32 %v2798, %v2628
        %v2800 = vadd.f32 %v2799, %v2629
        %v2801 = vadd.f32 %v2800, %v2630
        %2802 = vadd.xlane.f32.xlu0 %v2801
        %v2803 = vpop.xlane.xlu0 %2802
        %v2804 = vadd.f32 %v2631, %v2632
        %v2805 = vadd.f32 %v2804, %v2633
        %v2806 = vadd.f32 %v2805, %v2634
        %v2807 = vadd.f32 %v2806, %v2635
        %v2808 = vadd.f32 %v2807, %v2636
        %v2809 = vadd.f32 %v2808, %v2637
        %v2810 = vadd.f32 %v2809, %v2638
        %v2811 = vadd.f32 %v2810, %v2639
        %v2812 = vadd.f32 %v2811, %v2640
        %v2813 = vadd.f32 %v2812, %v2641
        %v2814 = vadd.f32 %v2813, %v2642
        %v2815 = vadd.f32 %v2814, %v2643
        %v2816 = vadd.f32 %v2815, %v2644
        %v2817 = vadd.f32 %v2816, %v2645
        %v2818 = vadd.f32 %v2817, %v2646
        %v2819 = vadd.f32 %v2818, %v2647
        %v2820 = vadd.f32 %v2819, %v2648
        %v2821 = vadd.f32 %v2820, %v2649
        %v2822 = vadd.f32 %v2821, %v2650
        %v2823 = vadd.f32 %v2822, %v2651
        %v2824 = vadd.f32 %v2823, %v2652
        %v2825 = vadd.f32 %v2824, %v2653
        %v2826 = vadd.f32 %v2825, %v2654
        %v2827 = vadd.f32 %v2826, %v2655
        %v2828 = vadd.f32 %v2827, %v2656
        %v2829 = vadd.f32 %v2828, %v2657
        %v2830 = vadd.f32 %v2829, %v2658
        %2831 = vadd.xlane.f32.xlu0 %v2830
        %v2832 = vpop.xlane.xlu0 %2831
        %v2833 = vmul.f32 %v2687, 0.00027901787
        %v2834 = vmul.f32 %v2716, 0.00027901787
        %v2835 = vmul.f32 %v2745, 0.00027901787
        %v2836 = vmul.f32 %v2774, 0.00027901787
        %v2837 = vmul.f32 %v2803, 0.00027901787
        %v2838 = vmul.f32 %v2832, 0.00027901787
        %v2839 = vld [vmem:[%s4] sm:$0xf]
        %v2840 = vld [vmem:[%s4 + $0x4] sm:$0xf]
        %v2841 = vld [vmem:[%s4 + $0x8] sm:$0xf]
        %v2842 = vld [vmem:[%s4 + $0xc] sm:$0xf]
        %v2843 = vld [vmem:[%s4 + $0x10] sm:$0xf]
        %v2844 = vld [vmem:[%s4 + $0x14] sm:$0xf]
        %v2845 = vunpack.c.l.bf16 %v2839
        %v2846 = vunpack.c.l.bf16 %v2840
        %v2847 = vunpack.c.l.bf16 %v2841
        %v2848 = vunpack.c.l.bf16 %v2842
        %v2849 = vunpack.c.l.bf16 %v2843
        %v2850 = vunpack.c.l.bf16 %v2844
        %v2851 = vmul.f32 %v2833, %v2845
        %v2852 = vmul.f32 %v2834, %v2846
        %v2853 = vmul.f32 %v2835, %v2847
        %v2854 = vmul.f32 %v2836, %v2848
        %v2855 = vmul.f32 %v2837, %v2849
        %v2856 = vmul.f32 %v2838, %v2850
        %v2857 = vadd.f32 %v2851, %v2852
        %v2858 = vadd.f32 %v2857, %v2853
        %v2859 = vadd.f32 %v2858, %v2854
        %v2860 = vadd.f32 %v2859, %v2855
        %v2861 = vadd.f32 %v2860, %v2856
        %v2862 = vrot.slane %v2861, 4
        %v2863 = vadd.f32 %v2861, %v2862
        %v2864 = vrot.slane %v2863, 2
        %v2865 = vadd.f32 %v2863, %v2864
        %v2866 = vrot.slane %v2865, 1
        %v2867 = vadd.f32 %v2865, %v2866
        %v2868 = vld [vmem:[%s5] sm:$0x1]
        %v2869 = vadd.f32 %v2867, %v2868
        %2870 = vst [vmem:[%s243] sm:$0x1] %v2869
        %s2871 = sand.u32 %s159, 1
        %s2872 = scalar_lea.sflag [#allocation3], %s2871
        %s2873 = sand.u32 %s159, 1
        %s2874 = scalar_lea.vmem [#allocation2], %s2873
        // Predicated region
        $region45: #{mymodel2_forward.1} parent=43 // pred_check
          %p2875 = pneg %p169
        $region46: #{mymodel2_forward.1} parent=43 // pred_check_branch
          %2877 = sbr.rel (%p2875) target = $region48
        $region47: #{mymodel2_forward.1} parent=43 // pred_region
          %s2879 = ssub.s32 16, 16
          %2880 = vsyncadd %s2872, %s2879
          %s2881 = smul.addr %s20, 16
          %s2882 = scalar_lea.hbm %s6, %s2881
          %s2884 = sshll.u32 %s2874, 4
          %s2885 = int_to_ptr.vmem [resolvable:$true] %s2884
          %2887 = dma.vmem_to_hbm [thread:$0]  %s2885, 16, %s2882, %s2872
        $region48: #{mymodel2_forward.1} parent=43 // pred_fallthru
          _
      $region44: #{mymodel2_forward.1} parent=5 // pred_fallthru
        _
      %p2888 = scmp.le.s32.totalorder 2, %s15
      // Predicated region
      $region49: #{mymodel2_forward.1} parent=5 // pred_check
        %p2889 = pneg %p2888
      $region50: #{mymodel2_forward.1} parent=5 // pred_check_branch
        %2891 = sbr.rel (%p2889) target = $region52
      $region51: #{mymodel2_forward.1} parent=5 // pred_region
        %s2892 = ssub.s32 %s15, 2
        // Predicated region
        $region53: #{mymodel2_forward.1} parent=51 // pred_check
          %p2893 = pneg %p175
        $region54: #{mymodel2_forward.1} parent=51 // pred_check_branch
          %2895 = sbr.rel (%p2893) target = $region56
        $region55: #{mymodel2_forward.1} parent=51 // pred_region
          %s2896 = sand.u32 %s160, 1
          %s2897 = scalar_lea.sflag [#allocation3], %s2896
          %s2898 = sand.u32 %s160, 1
          %s2899 = scalar_lea.vmem [#allocation2], %s2898
          %2900 = dma.done %s2897, 16
        $region56: #{mymodel2_forward.1} parent=51 // pred_fallthru
          _
      $region52: #{mymodel2_forward.1} parent=5 // pred_fallthru
        _
    $region6: #{mymodel2_forward.1} parent=1 // loop_footer
      %s19 = sadd.s32 1, %s15
    $region7: #{mymodel2_forward.1} parent=1 // loop_footer_branch
      %14 = sbr.rel target = $region3
    $region8: #{mymodel2_forward.1} parent=1 // loop_exit
      _
    %2901 = vsyncpa [#allocation3], 1
    %s2902 = scalar_lea.sflag [#allocation3], 1
    %2903 = vsyncpa %s2902, 1

</llo_original>
